<compile_context>
chip_gen: v6e
topology: v6e:2x2x1
jax: 0.10.0
libtpu: 0.0.40
codegen_flags: <defaults>
</compile_context>

<pallas_src>
import functools

import jax
import jax.numpy as jnp
from jax import lax
from jax.experimental import pallas as pl
from jax.experimental.pallas import tpu as pltpu


GATE_BLOCK = 128   # lanes per gate block: [fwd(H) | bwd(H) | pad]  (one vreg)
NUM_GATES = 4      # PyTorch gate order i, f, g, o
TAG_BLOCK = 128    # padded output (tag) lane width


# ----------------------------------------------------------------------------
# Pallas kernel: interleaved bidirectional LSTM + split linear head.
# ----------------------------------------------------------------------------
def _bilstm_tagger_kernel(
    x_ref,        # (S, E)        embedded inputs (forward time order)
    xrev_ref,     # (S, E)        embedded inputs reversed in time
    wihf_ref,     # (E, 512)      fwd input->gate weights, scattered gate cols
    wihb_ref,     # (E, 512)      bwd input->gate weights, scattered gate cols
    ball_ref,     # (1, 512)      combined biases, scattered gate cols
    whh_ref,      # (128, 512)    block-diagonal hidden->gate weights (both dirs)
    wlinA_ref,    # (128, 128)    linear head, forward-hidden rows only
    wlinB_ref,    # (128, 128)    linear head, backward-hidden rows only
    blin_ref,     # (1, 128)      linear bias (padded)
    out_ref,      # (S, 128)      padded tag scores
    xw_scr,       # (S, 512)      precomputed input projections (both dirs)
    ha_scr,       # (S, 128)      packed hidden written at forward-time row
    hb_scr,       # (S, 128)      packed hidden written at backward-time row
):
    S = x_ref.shape[0]
    SW = whh_ref.shape[0]          # 128 packed-state width
    GW = whh_ref.shape[1]          # 512 total gate lanes
    GB = GW // NUM_GATES           # 128 lanes per gate block

    # ---- hoisted input projection, both directions, one pass (dense MXU) ----
    # Row k holds: fwd projection of x[k] in fwd lanes, bwd projection of
    # x[S-1-k] in bwd lanes (because xrev row k == x row S-1-k), plus biases.
    xw_scr[...] = (
        jnp.dot(x_ref[...], wihf_ref[...], preferred_element_type=jnp.float32)
        + jnp.dot(xrev_ref[...], wihb_ref[...], preferred_element_type=jnp.float32)
        + ball_ref[...]
    )

    whh = whh_ref[...]
    h0 = jnp.zeros((1, SW), jnp.float32)
    c0 = jnp.zeros((1, SW), jnp.float32)

    # ---- interleaved fwd/bwd recurrence, single matmul per step ----
    def step(k, carry):
        h, c = carry  # packed (1,128): [h_f | h_b | pad]
        gates = (
            jnp.dot(h, whh, preferred_element_type=jnp.float32)
            + xw_scr[pl.ds(k, 1), :]
        )  # (1, 512) = [i | f | g | o], each 128-lane block packs both dirs
        i = jax.nn.sigmoid(gates[:, 0 * GB:1 * GB])
        f = jax.nn.sigmoid(gates[:, 1 * GB:2 * GB])
        g = jnp.tanh(gates[:, 2 * GB:3 * GB])
        o = jax.nn.sigmoid(gates[:, 3 * GB:4 * GB])
        c_new = f * c + i * g
        h_new = o * jnp.tanh(c_new)
        # Forward lanes are valid for time k; backward lanes for time S-1-k.
        ha_scr[pl.ds(k, 1), :] = h_new
        hb_scr[pl.ds(S - 1 - k, 1), :] = h_new
        return (h_new, c_new)

    lax.fori_loop(0, S, step, (h0, c0), unroll=True)

    # ---- linear head: split weight, no lane-axis concatenate ----
    out_ref[...] = (
        jnp.dot(ha_scr[...], wlinA_ref[...], preferred_element_type=jnp.float32)
        + jnp.dot(hb_scr[...], wlinB_ref[...], preferred_element_type=jnp.float32)
        + blin_ref[...]
    )


# ----------------------------------------------------------------------------
# Parameter init (PyTorch-style shapes).
# ----------------------------------------------------------------------------
def init_params(key, num_words, num_tags, emb_size, rnn_size):
    ks = jax.random.split(key, 10)
    H, E, T = rnn_size, emb_size, num_tags
    scale_l = 1.0 / jnp.sqrt(H)
    scale_fc = 1.0 / jnp.sqrt(2 * H)
    u = lambda k, shape, s: jax.random.uniform(k, shape, jnp.float32, -s, s)
    return {
        "embedding": jax.random.normal(ks[0], (num_words + 1, E), jnp.float32),
        "w_ih_f": u(ks[1], (4 * H, E), scale_l),
        "w_hh_f": u(ks[2], (4 * H, H), scale_l),
        "b_ih_f": u(ks[3], (4 * H,), scale_l),
        "b_hh_f": u(ks[4], (4 * H,), scale_l),
        "w_ih_b": u(ks[5], (4 * H, E), scale_l),
        "w_hh_b": u(ks[6], (4 * H, H), scale_l),
        "b_ih_b": u(ks[7], (4 * H,), scale_l),
        "b_hh_b": u(ks[8], (4 * H,), scale_l),
        "w_lin": u(ks[9], (T, 2 * H), scale_fc),
        "b_lin": jnp.zeros((T,), jnp.float32),
    }


# ----------------------------------------------------------------------------
# Wrapper: weight re-layout (glue) + embedding gather (glue) + pallas_call.
# ----------------------------------------------------------------------------
def _scatter_gate_cols(w_t, H, dir_off):
    """Scatter PyTorch-ordered gate columns (rows, 4H) into (rows, 4*128).

    Gate g's H columns land at lanes [g*128 + dir_off, g*128 + dir_off + H);
    remaining lanes are zero. dir_off=0 for forward, H for backward.
    """
    rows = w_t.shape[0]
    out = jnp.zeros((rows, NUM_GATES * GATE_BLOCK), jnp.float32)
    for g in range(NUM_GATES):
        out = out.at[:, g * GATE_BLOCK + dir_off:
                        g * GATE_BLOCK + dir_off + H].set(
            w_t[:, g * H:(g + 1) * H])
    return out


@functools.partial(jax.jit, static_argnames=())
def tagger_forward(input_ids, params):
    emb = jnp.take(params["embedding"], input_ids, axis=0).astype(jnp.float32)
    emb_rev = emb[::-1]

    S, E = emb.shape
    H = params["w_hh_f"].shape[1]
    T = params["w_lin"].shape[0]
    assert 2 * H <= GATE_BLOCK and T <= TAG_BLOCK
    GW = NUM_GATES * GATE_BLOCK      # 512
    SW = GATE_BLOCK                  # 128 packed-state width

    # Input->gate weights, scattered into the padded gate-column layout.
    wih_sc_f = _scatter_gate_cols(params["w_ih_f"].T, H, 0)        # (E, 512)
    wih_sc_b = _scatter_gate_cols(params["w_ih_b"].T, H, H)        # (E, 512)
    b_all = (_scatter_gate_cols((params["b_ih_f"] + params["b_hh_f"]).reshape(1, 4 * H), H, 0)
             + _scatter_gate_cols((params["b_ih_b"] + params["b_hh_b"]).reshape(1, 4 * H), H, H))

    # Block-diagonal hidden->gate matrix over the packed [h_f | h_b | pad] state.
    whh_blk = jnp.zeros((SW, GW), jnp.float32)
    whh_blk = whh_blk.at[0:H, :].set(_scatter_gate_cols(params["w_hh_f"].T, H, 0))
    whh_blk = whh_blk.at[H:2 * H, :].set(_scatter_gate_cols(params["w_hh_b"].T, H, H))

    # Split + pad the linear head (forward-hidden rows / backward-hidden rows).
    wlin_t = params["w_lin"].T                                     # (2H, T)
    wlinA = jnp.zeros((SW, TAG_BLOCK), jnp.float32).at[0:H, 0:T].set(wlin_t[0:H])
    wlinB = jnp.zeros((SW, TAG_BLOCK), jnp.float32).at[H:2 * H, 0:T].set(wlin_t[H:2 * H])
    blin_pad = jnp.zeros((1, TAG_BLOCK), jnp.float32).at[0, 0:T].set(params["b_lin"])

    vmem = pl.BlockSpec(memory_space=pltpu.MemorySpace.VMEM)
    out_pad = pl.pallas_call(
        _bilstm_tagger_kernel,
        out_shape=jax.ShapeDtypeStruct((S, TAG_BLOCK), jnp.float32),
        in_specs=[vmem] * 9,
        out_specs=vmem,
        scratch_shapes=[
            pltpu.VMEM((S, GW), jnp.float32),   # precomputed input projections
            pltpu.VMEM((S, SW), jnp.float32),   # hidden, forward-time rows
            pltpu.VMEM((S, SW), jnp.float32),   # hidden, backward-time rows
        ],
    )(emb, emb_rev, wih_sc_f, wih_sc_b, b_all, whh_blk, wlinA, wlinB, blin_pad)
    return out_pad[:, :T]


# ----------------------------------------------------------------------------
# Pure-JAX reference (correctness check only).
# ----------------------------------------------------------------------------
def tagger_reference(input_ids, params):
    emb = jnp.take(params["embedding"], input_ids, axis=0)
    H = params["w_hh_f"].shape[1]

    def run_dir(xs, w_ih, w_hh, b_ih, b_hh):
        def step(carry, x_t):
            h, c = carry
            gates = x_t @ w_ih.T + h @ w_hh.T + b_ih + b_hh
            i = jax.nn.sigmoid(gates[0 * H:1 * H])
            f = jax.nn.sigmoid(gates[1 * H:2 * H])
            g = jnp.tanh(gates[2 * H:3 * H])
            o = jax.nn.sigmoid(gates[3 * H:4 * H])
            c_new = f * c + i * g
            h_new = o * jnp.tanh(c_new)
            return (h_new, c_new), h_new

        init = (jnp.zeros((H,), jnp.float32), jnp.zeros((H,), jnp.float32))
        _, hs = lax.scan(step, init, xs)
        return hs

    hf = run_dir(emb, params["w_ih_f"], params["w_hh_f"],
                 params["b_ih_f"], params["b_hh_f"])
    hb = run_dir(emb[::-1], params["w_ih_b"], params["w_hh_b"],
                 params["b_ih_b"], params["b_hh_b"])[::-1]
    h_cat = jnp.concatenate([hf, hb], axis=-1)
    return h_cat @ params["w_lin"].T + params["b_lin"]


if __name__ == "__main__":
    NUM_WORDS = 50
    NUM_TAGS = 16
    EMB_SIZE = 32
    RNN_SIZE = 32
    SEQ_LEN = 8

    key = jax.random.PRNGKey(0)
    k_param, k_ids = jax.random.split(key)
    params = init_params(k_param, NUM_WORDS, NUM_TAGS, EMB_SIZE, RNN_SIZE)
    input_ids = jax.random.randint(k_ids, (SEQ_LEN,), 0, NUM_WORDS + 1, jnp.int32)

    scores = tagger_forward(input_ids, params)
    scores = jax.block_until_ready(scores)

    ref = tagger_reference(input_ids, params)
    assert scores.shape == (SEQ_LEN, NUM_TAGS)
    assert jnp.allclose(scores, ref, rtol=1e-3, atol=1e-3), "mismatch vs reference"

    print("KERNEL_OK")
</pallas_src>

<mosaic_0001>
module attributes {stable_mosaic.version = 11 : i64} {
  func.func @_bilstm_tagger_kernel(%arg0: memref<8x32xf32, #tpu.memory_space<vmem>>, %arg1: memref<8x32xf32, #tpu.memory_space<vmem>>, %arg2: memref<32x512xf32, #tpu.memory_space<vmem>>, %arg3: memref<32x512xf32, #tpu.memory_space<vmem>>, %arg4: memref<1x512xf32, #tpu.memory_space<vmem>>, %arg5: memref<128x512xf32, #tpu.memory_space<vmem>>, %arg6: memref<128x128xf32, #tpu.memory_space<vmem>>, %arg7: memref<128x128xf32, #tpu.memory_space<vmem>>, %arg8: memref<1x128xf32, #tpu.memory_space<vmem>>, %arg9: memref<8x128xf32, #tpu.memory_space<vmem>>, %arg10: memref<8x512xf32, #tpu.memory_space<vmem>>, %arg11: memref<8x128xf32, #tpu.memory_space<vmem>>, %arg12: memref<8x128xf32, #tpu.memory_space<vmem>>) attributes {dimension_semantics = [], scalar_prefetch = 0 : i64, scratch_operands = 3 : i64, tpu.core_type = #tpu.core_type<tc>} {
    %c0 = arith.constant 0 : index
    %c0_0 = arith.constant 0 : index
    %0 = vector.load %arg0[%c0, %c0_0] : memref<8x32xf32, #tpu.memory_space<vmem>>, vector<8x32xf32>
    %c0_1 = arith.constant 0 : index
    %c0_2 = arith.constant 0 : index
    %1 = vector.load %arg2[%c0_1, %c0_2] : memref<32x512xf32, #tpu.memory_space<vmem>>, vector<32x512xf32>
    %cst = arith.constant dense<0.000000e+00> : vector<8x512xf32>
    %2 = tpu.matmul %0, %1, %cst {dimension_numbers = #tpu.dot_dimension_numbers<[1], [0], [0], [1], [0, 0, 1, 1], [], []>} : vector<8x32xf32>, vector<32x512xf32>, vector<8x512xf32> -> vector<8x512xf32>
    %c0_3 = arith.constant 0 : index
    %c0_4 = arith.constant 0 : index
    %3 = vector.load %arg1[%c0_3, %c0_4] : memref<8x32xf32, #tpu.memory_space<vmem>>, vector<8x32xf32>
    %c0_5 = arith.constant 0 : index
    %c0_6 = arith.constant 0 : index
    %4 = vector.load %arg3[%c0_5, %c0_6] : memref<32x512xf32, #tpu.memory_space<vmem>>, vector<32x512xf32>
    %cst_7 = arith.constant dense<0.000000e+00> : vector<8x512xf32>
    %5 = tpu.matmul %3, %4, %cst_7 {dimension_numbers = #tpu.dot_dimension_numbers<[1], [0], [0], [1], [0, 0, 1, 1], [], []>} : vector<8x32xf32>, vector<32x512xf32>, vector<8x512xf32> -> vector<8x512xf32>
    %6 = arith.addf %2, %5 : vector<8x512xf32>
    %c0_8 = arith.constant 0 : index
    %c0_9 = arith.constant 0 : index
    %7 = vector.load %arg4[%c0_8, %c0_9] : memref<1x512xf32, #tpu.memory_space<vmem>>, vector<1x512xf32>
    %8 = vector.broadcast %7 : vector<1x512xf32> to vector<8x512xf32>
    %9 = arith.addf %6, %8 : vector<8x512xf32>
    %c0_10 = arith.constant 0 : index
    %c0_11 = arith.constant 0 : index
    %10 = vector.load %arg10[%c0_10, %c0_11] : memref<8x512xf32, #tpu.memory_space<vmem>>, vector<8x512xf32>
    tpu.vector_store %arg10[%c0_10, %c0_11], %9 {strides = array<i32>} : memref<8x512xf32, #tpu.memory_space<vmem>>, vector<8x512xf32>,
    %c0_12 = arith.constant 0 : index
    %c0_13 = arith.constant 0 : index
    %11 = vector.load %arg5[%c0_12, %c0_13] : memref<128x512xf32, #tpu.memory_space<vmem>>, vector<128x512xf32>
    %cst_14 = arith.constant 0.000000e+00 : f32
    %12 = vector.broadcast %cst_14 : f32 to vector<1x128xf32>
    %cst_15 = arith.constant 0.000000e+00 : f32
    %13 = vector.broadcast %cst_15 : f32 to vector<1x128xf32>
    %c0_i32 = arith.constant 0 : i32
    %cst_16 = arith.constant dense<0.000000e+00> : vector<1x512xf32>
    %14 = tpu.matmul %12, %11, %cst_16 {dimension_numbers = #tpu.dot_dimension_numbers<[1], [0], [0], [1], [0, 0, 1, 1], [], []>} : vector<1x128xf32>, vector<128x512xf32>, vector<1x512xf32> -> vector<1x512xf32>
    %15 = arith.index_cast %c0_i32 : i32 to index
    %c0_17 = arith.constant 0 : index
    %16 = vector.load %arg10[%15, %c0_17] : memref<8x512xf32, #tpu.memory_space<vmem>>, vector<1x512xf32>
    %17 = arith.addf %14, %16 : vector<1x512xf32>
    %18 = vector.extract_strided_slice %17 {offsets = [0, 0], sizes = [1, 128], strides = [1, 1]} : vector<1x512xf32> to vector<1x128xf32>
    %19 = arith.negf %18 : vector<1x128xf32>
    %20 = math.exp %19 : vector<1x128xf32>
    %cst_18 = arith.constant 1.000000e+00 : f32
    %21 = vector.broadcast %cst_18 : f32 to vector<1x128xf32>
    %22 = arith.addf %21, %20 : vector<1x128xf32>
    %23 = arith.divf %21, %22 : vector<1x128xf32>
    %24 = vector.extract_strided_slice %17 {offsets = [0, 128], sizes = [1, 128], strides = [1, 1]} : vector<1x512xf32> to vector<1x128xf32>
    %25 = arith.negf %24 : vector<1x128xf32>
    %26 = math.exp %25 : vector<1x128xf32>
    %cst_19 = arith.constant 1.000000e+00 : f32
    %27 = vector.broadcast %cst_19 : f32 to vector<1x128xf32>
    %28 = arith.addf %27, %26 : vector<1x128xf32>
    %29 = arith.divf %27, %28 : vector<1x128xf32>
    %30 = vector.extract_strided_slice %17 {offsets = [0, 256], sizes = [1, 128], strides = [1, 1]} : vector<1x512xf32> to vector<1x128xf32>
    %31 = math.tanh %30 : vector<1x128xf32>
    %32 = vector.extract_strided_slice %17 {offsets = [0, 384], sizes = [1, 128], strides = [1, 1]} : vector<1x512xf32> to vector<1x128xf32>
    %33 = arith.negf %32 : vector<1x128xf32>
    %34 = math.exp %33 : vector<1x128xf32>
    %cst_20 = arith.constant 1.000000e+00 : f32
    %35 = vector.broadcast %cst_20 : f32 to vector<1x128xf32>
    %36 = arith.addf %35, %34 : vector<1x128xf32>
    %37 = arith.divf %35, %36 : vector<1x128xf32>
    %38 = arith.mulf %29, %13 : vector<1x128xf32>
    %39 = arith.mulf %23, %31 : vector<1x128xf32>
    %40 = arith.addf %38, %39 : vector<1x128xf32>
    %41 = math.tanh %40 : vector<1x128xf32>
    %42 = arith.mulf %37, %41 : vector<1x128xf32>
    %43 = arith.index_cast %c0_i32 : i32 to index
    %c0_21 = arith.constant 0 : index
    %44 = vector.load %arg11[%43, %c0_21] : memref<8x128xf32, #tpu.memory_space<vmem>>, vector<1x128xf32>
    tpu.vector_store %arg11[%43, %c0_21], %42 {strides = array<i32>} : memref<8x128xf32, #tpu.memory_space<vmem>>, vector<1x128xf32>,
    %c7_i32 = arith.constant 7 : i32
    %45 = arith.subi %c7_i32, %c0_i32 : i32
    %46 = arith.index_cast %45 : i32 to index
    %c0_22 = arith.constant 0 : index
    %47 = vector.load %arg12[%46, %c0_22] : memref<8x128xf32, #tpu.memory_space<vmem>>, vector<1x128xf32>
    tpu.vector_store %arg12[%46, %c0_22], %42 {strides = array<i32>} : memref<8x128xf32, #tpu.memory_space<vmem>>, vector<1x128xf32>,
    %c1_i32 = arith.constant 1 : i32
    %cst_23 = arith.constant dense<0.000000e+00> : vector<1x512xf32>
    %48 = tpu.matmul %42, %11, %cst_23 {dimension_numbers = #tpu.dot_dimension_numbers<[1], [0], [0], [1], [0, 0, 1, 1], [], []>} : vector<1x128xf32>, vector<128x512xf32>, vector<1x512xf32> -> vector<1x512xf32>
    %49 = arith.index_cast %c1_i32 : i32 to index
    %c0_24 = arith.constant 0 : index
    %50 = vector.load %arg10[%49, %c0_24] : memref<8x512xf32, #tpu.memory_space<vmem>>, vector<1x512xf32>
    %51 = arith.addf %48, %50 : vector<1x512xf32>
    %52 = vector.extract_strided_slice %51 {offsets = [0, 0], sizes = [1, 128], strides = [1, 1]} : vector<1x512xf32> to vector<1x128xf32>
    %53 = arith.negf %52 : vector<1x128xf32>
    %54 = math.exp %53 : vector<1x128xf32>
    %cst_25 = arith.constant 1.000000e+00 : f32
    %55 = vector.broadcast %cst_25 : f32 to vector<1x128xf32>
    %56 = arith.addf %55, %54 : vector<1x128xf32>
    %57 = arith.divf %55, %56 : vector<1x128xf32>
    %58 = vector.extract_strided_slice %51 {offsets = [0, 128], sizes = [1, 128], strides = [1, 1]} : vector<1x512xf32> to vector<1x128xf32>
    %59 = arith.negf %58 : vector<1x128xf32>
    %60 = math.exp %59 : vector<1x128xf32>
    %cst_26 = arith.constant 1.000000e+00 : f32
    %61 = vector.broadcast %cst_26 : f32 to vector<1x128xf32>
    %62 = arith.addf %61, %60 : vector<1x128xf32>
    %63 = arith.divf %61, %62 : vector<1x128xf32>
    %64 = vector.extract_strided_slice %51 {offsets = [0, 256], sizes = [1, 128], strides = [1, 1]} : vector<1x512xf32> to vector<1x128xf32>
    %65 = math.tanh %64 : vector<1x128xf32>
    %66 = vector.extract_strided_slice %51 {offsets = [0, 384], sizes = [1, 128], strides = [1, 1]} : vector<1x512xf32> to vector<1x128xf32>
    %67 = arith.negf %66 : vector<1x128xf32>
    %68 = math.exp %67 : vector<1x128xf32>
    %cst_27 = arith.constant 1.000000e+00 : f32
    %69 = vector.broadcast %cst_27 : f32 to vector<1x128xf32>
    %70 = arith.addf %69, %68 : vector<1x128xf32>
    %71 = arith.divf %69, %70 : vector<1x128xf32>
    %72 = arith.mulf %63, %40 : vector<1x128xf32>
    %73 = arith.mulf %57, %65 : vector<1x128xf32>
    %74 = arith.addf %72, %73 : vector<1x128xf32>
    %75 = math.tanh %74 : vector<1x128xf32>
    %76 = arith.mulf %71, %75 : vector<1x128xf32>
    %77 = arith.index_cast %c1_i32 : i32 to index
    %c0_28 = arith.constant 0 : index
    %78 = vector.load %arg11[%77, %c0_28] : memref<8x128xf32, #tpu.memory_space<vmem>>, vector<1x128xf32>
    tpu.vector_store %arg11[%77, %c0_28], %76 {strides = array<i32>} : memref<8x128xf32, #tpu.memory_space<vmem>>, vector<1x128xf32>,
    %c7_i32_29 = arith.constant 7 : i32
    %79 = arith.subi %c7_i32_29, %c1_i32 : i32
    %80 = arith.index_cast %79 : i32 to index
    %c0_30 = arith.constant 0 : index
    %81 = vector.load %arg12[%80, %c0_30] : memref<8x128xf32, #tpu.memory_space<vmem>>, vector<1x128xf32>
    tpu.vector_store %arg12[%80, %c0_30], %76 {strides = array<i32>} : memref<8x128xf32, #tpu.memory_space<vmem>>, vector<1x128xf32>,
    %c2_i32 = arith.constant 2 : i32
    %cst_31 = arith.constant dense<0.000000e+00> : vector<1x512xf32>
    %82 = tpu.matmul %76, %11, %cst_31 {dimension_numbers = #tpu.dot_dimension_numbers<[1], [0], [0], [1], [0, 0, 1, 1], [], []>} : vector<1x128xf32>, vector<128x512xf32>, vector<1x512xf32> -> vector<1x512xf32>
    %83 = arith.index_cast %c2_i32 : i32 to index
    %c0_32 = arith.constant 0 : index
    %84 = vector.load %arg10[%83, %c0_32] : memref<8x512xf32, #tpu.memory_space<vmem>>, vector<1x512xf32>
    %85 = arith.addf %82, %84 : vector<1x512xf32>
    %86 = vector.extract_strided_slice %85 {offsets = [0, 0], sizes = [1, 128], strides = [1, 1]} : vector<1x512xf32> to vector<1x128xf32>
    %87 = arith.negf %86 : vector<1x128xf32>
    %88 = math.exp %87 : vector<1x128xf32>
    %cst_33 = arith.constant 1.000000e+00 : f32
    %89 = vector.broadcast %cst_33 : f32 to vector<1x128xf32>
    %90 = arith.addf %89, %88 : vector<1x128xf32>
    %91 = arith.divf %89, %90 : vector<1x128xf32>
    %92 = vector.extract_strided_slice %85 {offsets = [0, 128], sizes = [1, 128], strides = [1, 1]} : vector<1x512xf32> to vector<1x128xf32>
    %93 = arith.negf %92 : vector<1x128xf32>
    %94 = math.exp %93 : vector<1x128xf32>
    %cst_34 = arith.constant 1.000000e+00 : f32
    %95 = vector.broadcast %cst_34 : f32 to vector<1x128xf32>
    %96 = arith.addf %95, %94 : vector<1x128xf32>
    %97 = arith.divf %95, %96 : vector<1x128xf32>
    %98 = vector.extract_strided_slice %85 {offsets = [0, 256], sizes = [1, 128], strides = [1, 1]} : vector<1x512xf32> to vector<1x128xf32>
    %99 = math.tanh %98 : vector<1x128xf32>
    %100 = vector.extract_strided_slice %85 {offsets = [0, 384], sizes = [1, 128], strides = [1, 1]} : vector<1x512xf32> to vector<1x128xf32>
    %101 = arith.negf %100 : vector<1x128xf32>
    %102 = math.exp %101 : vector<1x128xf32>
    %cst_35 = arith.constant 1.000000e+00 : f32
    %103 = vector.broadcast %cst_35 : f32 to vector<1x128xf32>
    %104 = arith.addf %103, %102 : vector<1x128xf32>
    %105 = arith.divf %103, %104 : vector<1x128xf32>
    %106 = arith.mulf %97, %74 : vector<1x128xf32>
    %107 = arith.mulf %91, %99 : vector<1x128xf32>
    %108 = arith.addf %106, %107 : vector<1x128xf32>
    %109 = math.tanh %108 : vector<1x128xf32>
    %110 = arith.mulf %105, %109 : vector<1x128xf32>
    %111 = arith.index_cast %c2_i32 : i32 to index
    %c0_36 = arith.constant 0 : index
    %112 = vector.load %arg11[%111, %c0_36] : memref<8x128xf32, #tpu.memory_space<vmem>>, vector<1x128xf32>
    tpu.vector_store %arg11[%111, %c0_36], %110 {strides = array<i32>} : memref<8x128xf32, #tpu.memory_space<vmem>>, vector<1x128xf32>,
    %c7_i32_37 = arith.constant 7 : i32
    %113 = arith.subi %c7_i32_37, %c2_i32 : i32
    %114 = arith.index_cast %113 : i32 to index
    %c0_38 = arith.constant 0 : index
    %115 = vector.load %arg12[%114, %c0_38] : memref<8x128xf32, #tpu.memory_space<vmem>>, vector<1x128xf32>
    tpu.vector_store %arg12[%114, %c0_38], %110 {strides = array<i32>} : memref<8x128xf32, #tpu.memory_space<vmem>>, vector<1x128xf32>,
    %c3_i32 = arith.constant 3 : i32
    %cst_39 = arith.constant dense<0.000000e+00> : vector<1x512xf32>
    %116 = tpu.matmul %110, %11, %cst_39 {dimension_numbers = #tpu.dot_dimension_numbers<[1], [0], [0], [1], [0, 0, 1, 1], [], []>} : vector<1x128xf32>, vector<128x512xf32>, vector<1x512xf32> -> vector<1x512xf32>
    %117 = arith.index_cast %c3_i32 : i32 to index
    %c0_40 = arith.constant 0 : index
    %118 = vector.load %arg10[%117, %c0_40] : memref<8x512xf32, #tpu.memory_space<vmem>>, vector<1x512xf32>
    %119 = arith.addf %116, %118 : vector<1x512xf32>
    %120 = vector.extract_strided_slice %119 {offsets = [0, 0], sizes = [1, 128], strides = [1, 1]} : vector<1x512xf32> to vector<1x128xf32>
    %121 = arith.negf %120 : vector<1x128xf32>
    %122 = math.exp %121 : vector<1x128xf32>
    %cst_41 = arith.constant 1.000000e+00 : f32
    %123 = vector.broadcast %cst_41 : f32 to vector<1x128xf32>
    %124 = arith.addf %123, %122 : vector<1x128xf32>
    %125 = arith.divf %123, %124 : vector<1x128xf32>
    %126 = vector.extract_strided_slice %119 {offsets = [0, 128], sizes = [1, 128], strides = [1, 1]} : vector<1x512xf32> to vector<1x128xf32>
    %127 = arith.negf %126 : vector<1x128xf32>
    %128 = math.exp %127 : vector<1x128xf32>
    %cst_42 = arith.constant 1.000000e+00 : f32
    %129 = vector.broadcast %cst_42 : f32 to vector<1x128xf32>
    %130 = arith.addf %129, %128 : vector<1x128xf32>
    %131 = arith.divf %129, %130 : vector<1x128xf32>
    %132 = vector.extract_strided_slice %119 {offsets = [0, 256], sizes = [1, 128], strides = [1, 1]} : vector<1x512xf32> to vector<1x128xf32>
    %133 = math.tanh %132 : vector<1x128xf32>
    %134 = vector.extract_strided_slice %119 {offsets = [0, 384], sizes = [1, 128], strides = [1, 1]} : vector<1x512xf32> to vector<1x128xf32>
    %135 = arith.negf %134 : vector<1x128xf32>
    %136 = math.exp %135 : vector<1x128xf32>
    %cst_43 = arith.constant 1.000000e+00 : f32
    %137 = vector.broadcast %cst_43 : f32 to vector<1x128xf32>
    %138 = arith.addf %137, %136 : vector<1x128xf32>
    %139 = arith.divf %137, %138 : vector<1x128xf32>
    %140 = arith.mulf %131, %108 : vector<1x128xf32>
    %141 = arith.mulf %125, %133 : vector<1x128xf32>
    %142 = arith.addf %140, %141 : vector<1x128xf32>
    %143 = math.tanh %142 : vector<1x128xf32>
    %144 = arith.mulf %139, %143 : vector<1x128xf32>
    %145 = arith.index_cast %c3_i32 : i32 to index
    %c0_44 = arith.constant 0 : index
    %146 = vector.load %arg11[%145, %c0_44] : memref<8x128xf32, #tpu.memory_space<vmem>>, vector<1x128xf32>
    tpu.vector_store %arg11[%145, %c0_44], %144 {strides = array<i32>} : memref<8x128xf32, #tpu.memory_space<vmem>>, vector<1x128xf32>,
    %c7_i32_45 = arith.constant 7 : i32
    %147 = arith.subi %c7_i32_45, %c3_i32 : i32
    %148 = arith.index_cast %147 : i32 to index
    %c0_46 = arith.constant 0 : index
    %149 = vector.load %arg12[%148, %c0_46] : memref<8x128xf32, #tpu.memory_space<vmem>>, vector<1x128xf32>
    tpu.vector_store %arg12[%148, %c0_46], %144 {strides = array<i32>} : memref<8x128xf32, #tpu.memory_space<vmem>>, vector<1x128xf32>,
    %c4_i32 = arith.constant 4 : i32
    %cst_47 = arith.constant dense<0.000000e+00> : vector<1x512xf32>
    %150 = tpu.matmul %144, %11, %cst_47 {dimension_numbers = #tpu.dot_dimension_numbers<[1], [0], [0], [1], [0, 0, 1, 1], [], []>} : vector<1x128xf32>, vector<128x512xf32>, vector<1x512xf32> -> vector<1x512xf32>
    %151 = arith.index_cast %c4_i32 : i32 to index
    %c0_48 = arith.constant 0 : index
    %152 = vector.load %arg10[%151, %c0_48] : memref<8x512xf32, #tpu.memory_space<vmem>>, vector<1x512xf32>
    %153 = arith.addf %150, %152 : vector<1x512xf32>
    %154 = vector.extract_strided_slice %153 {offsets = [0, 0], sizes = [1, 128], strides = [1, 1]} : vector<1x512xf32> to vector<1x128xf32>
    %155 = arith.negf %154 : vector<1x128xf32>
    %156 = math.exp %155 : vector<1x128xf32>
    %cst_49 = arith.constant 1.000000e+00 : f32
    %157 = vector.broadcast %cst_49 : f32 to vector<1x128xf32>
    %158 = arith.addf %157, %156 : vector<1x128xf32>
    %159 = arith.divf %157, %158 : vector<1x128xf32>
    %160 = vector.extract_strided_slice %153 {offsets = [0, 128], sizes = [1, 128], strides = [1, 1]} : vector<1x512xf32> to vector<1x128xf32>
    %161 = arith.negf %160 : vector<1x128xf32>
    %162 = math.exp %161 : vector<1x128xf32>
    %cst_50 = arith.constant 1.000000e+00 : f32
    %163 = vector.broadcast %cst_50 : f32 to vector<1x128xf32>
    %164 = arith.addf %163, %162 : vector<1x128xf32>
    %165 = arith.divf %163, %164 : vector<1x128xf32>
    %166 = vector.extract_strided_slice %153 {offsets = [0, 256], sizes = [1, 128], strides = [1, 1]} : vector<1x512xf32> to vector<1x128xf32>
    %167 = math.tanh %166 : vector<1x128xf32>
    %168 = vector.extract_strided_slice %153 {offsets = [0, 384], sizes = [1, 128], strides = [1, 1]} : vector<1x512xf32> to vector<1x128xf32>
    %169 = arith.negf %168 : vector<1x128xf32>
    %170 = math.exp %169 : vector<1x128xf32>
    %cst_51 = arith.constant 1.000000e+00 : f32
    %171 = vector.broadcast %cst_51 : f32 to vector<1x128xf32>
    %172 = arith.addf %171, %170 : vector<1x128xf32>
    %173 = arith.divf %171, %172 : vector<1x128xf32>
    %174 = arith.mulf %165, %142 : vector<1x128xf32>
    %175 = arith.mulf %159, %167 : vector<1x128xf32>
    %176 = arith.addf %174, %175 : vector<1x128xf32>
    %177 = math.tanh %176 : vector<1x128xf32>
    %178 = arith.mulf %173, %177 : vector<1x128xf32>
    %179 = arith.index_cast %c4_i32 : i32 to index
    %c0_52 = arith.constant 0 : index
    %180 = vector.load %arg11[%179, %c0_52] : memref<8x128xf32, #tpu.memory_space<vmem>>, vector<1x128xf32>
    tpu.vector_store %arg11[%179, %c0_52], %178 {strides = array<i32>} : memref<8x128xf32, #tpu.memory_space<vmem>>, vector<1x128xf32>,
    %c7_i32_53 = arith.constant 7 : i32
    %181 = arith.subi %c7_i32_53, %c4_i32 : i32
    %182 = arith.index_cast %181 : i32 to index
    %c0_54 = arith.constant 0 : index
    %183 = vector.load %arg12[%182, %c0_54] : memref<8x128xf32, #tpu.memory_space<vmem>>, vector<1x128xf32>
    tpu.vector_store %arg12[%182, %c0_54], %178 {strides = array<i32>} : memref<8x128xf32, #tpu.memory_space<vmem>>, vector<1x128xf32>,
    %c5_i32 = arith.constant 5 : i32
    %cst_55 = arith.constant dense<0.000000e+00> : vector<1x512xf32>
    %184 = tpu.matmul %178, %11, %cst_55 {dimension_numbers = #tpu.dot_dimension_numbers<[1], [0], [0], [1], [0, 0, 1, 1], [], []>} : vector<1x128xf32>, vector<128x512xf32>, vector<1x512xf32> -> vector<1x512xf32>
    %185 = arith.index_cast %c5_i32 : i32 to index
    %c0_56 = arith.constant 0 : index
    %186 = vector.load %arg10[%185, %c0_56] : memref<8x512xf32, #tpu.memory_space<vmem>>, vector<1x512xf32>
    %187 = arith.addf %184, %186 : vector<1x512xf32>
    %188 = vector.extract_strided_slice %187 {offsets = [0, 0], sizes = [1, 128], strides = [1, 1]} : vector<1x512xf32> to vector<1x128xf32>
    %189 = arith.negf %188 : vector<1x128xf32>
    %190 = math.exp %189 : vector<1x128xf32>
    %cst_57 = arith.constant 1.000000e+00 : f32
    %191 = vector.broadcast %cst_57 : f32 to vector<1x128xf32>
    %192 = arith.addf %191, %190 : vector<1x128xf32>
    %193 = arith.divf %191, %192 : vector<1x128xf32>
    %194 = vector.extract_strided_slice %187 {offsets = [0, 128], sizes = [1, 128], strides = [1, 1]} : vector<1x512xf32> to vector<1x128xf32>
    %195 = arith.negf %194 : vector<1x128xf32>
    %196 = math.exp %195 : vector<1x128xf32>
    %cst_58 = arith.constant 1.000000e+00 : f32
    %197 = vector.broadcast %cst_58 : f32 to vector<1x128xf32>
    %198 = arith.addf %197, %196 : vector<1x128xf32>
    %199 = arith.divf %197, %198 : vector<1x128xf32>
    %200 = vector.extract_strided_slice %187 {offsets = [0, 256], sizes = [1, 128], strides = [1, 1]} : vector<1x512xf32> to vector<1x128xf32>
    %201 = math.tanh %200 : vector<1x128xf32>
    %202 = vector.extract_strided_slice %187 {offsets = [0, 384], sizes = [1, 128], strides = [1, 1]} : vector<1x512xf32> to vector<1x128xf32>
    %203 = arith.negf %202 : vector<1x128xf32>
    %204 = math.exp %203 : vector<1x128xf32>
    %cst_59 = arith.constant 1.000000e+00 : f32
    %205 = vector.broadcast %cst_59 : f32 to vector<1x128xf32>
    %206 = arith.addf %205, %204 : vector<1x128xf32>
    %207 = arith.divf %205, %206 : vector<1x128xf32>
    %208 = arith.mulf %199, %176 : vector<1x128xf32>
    %209 = arith.mulf %193, %201 : vector<1x128xf32>
    %210 = arith.addf %208, %209 : vector<1x128xf32>
    %211 = math.tanh %210 : vector<1x128xf32>
    %212 = arith.mulf %207, %211 : vector<1x128xf32>
    %213 = arith.index_cast %c5_i32 : i32 to index
    %c0_60 = arith.constant 0 : index
    %214 = vector.load %arg11[%213, %c0_60] : memref<8x128xf32, #tpu.memory_space<vmem>>, vector<1x128xf32>
    tpu.vector_store %arg11[%213, %c0_60], %212 {strides = array<i32>} : memref<8x128xf32, #tpu.memory_space<vmem>>, vector<1x128xf32>,
    %c7_i32_61 = arith.constant 7 : i32
    %215 = arith.subi %c7_i32_61, %c5_i32 : i32
    %216 = arith.index_cast %215 : i32 to index
    %c0_62 = arith.constant 0 : index
    %217 = vector.load %arg12[%216, %c0_62] : memref<8x128xf32, #tpu.memory_space<vmem>>, vector<1x128xf32>
    tpu.vector_store %arg12[%216, %c0_62], %212 {strides = array<i32>} : memref<8x128xf32, #tpu.memory_space<vmem>>, vector<1x128xf32>,
    %c6_i32 = arith.constant 6 : i32
    %cst_63 = arith.constant dense<0.000000e+00> : vector<1x512xf32>
    %218 = tpu.matmul %212, %11, %cst_63 {dimension_numbers = #tpu.dot_dimension_numbers<[1], [0], [0], [1], [0, 0, 1, 1], [], []>} : vector<1x128xf32>, vector<128x512xf32>, vector<1x512xf32> -> vector<1x512xf32>
    %219 = arith.index_cast %c6_i32 : i32 to index
    %c0_64 = arith.constant 0 : index
    %220 = vector.load %arg10[%219, %c0_64] : memref<8x512xf32, #tpu.memory_space<vmem>>, vector<1x512xf32>
    %221 = arith.addf %218, %220 : vector<1x512xf32>
    %222 = vector.extract_strided_slice %221 {offsets = [0, 0], sizes = [1, 128], strides = [1, 1]} : vector<1x512xf32> to vector<1x128xf32>
    %223 = arith.negf %222 : vector<1x128xf32>
    %224 = math.exp %223 : vector<1x128xf32>
    %cst_65 = arith.constant 1.000000e+00 : f32
    %225 = vector.broadcast %cst_65 : f32 to vector<1x128xf32>
    %226 = arith.addf %225, %224 : vector<1x128xf32>
    %227 = arith.divf %225, %226 : vector<1x128xf32>
    %228 = vector.extract_strided_slice %221 {offsets = [0, 128], sizes = [1, 128], strides = [1, 1]} : vector<1x512xf32> to vector<1x128xf32>
    %229 = arith.negf %228 : vector<1x128xf32>
    %230 = math.exp %229 : vector<1x128xf32>
    %cst_66 = arith.constant 1.000000e+00 : f32
    %231 = vector.broadcast %cst_66 : f32 to vector<1x128xf32>
    %232 = arith.addf %231, %230 : vector<1x128xf32>
    %233 = arith.divf %231, %232 : vector<1x128xf32>
    %234 = vector.extract_strided_slice %221 {offsets = [0, 256], sizes = [1, 128], strides = [1, 1]} : vector<1x512xf32> to vector<1x128xf32>
    %235 = math.tanh %234 : vector<1x128xf32>
    %236 = vector.extract_strided_slice %221 {offsets = [0, 384], sizes = [1, 128], strides = [1, 1]} : vector<1x512xf32> to vector<1x128xf32>
    %237 = arith.negf %236 : vector<1x128xf32>
    %238 = math.exp %237 : vector<1x128xf32>
    %cst_67 = arith.constant 1.000000e+00 : f32
    %239 = vector.broadcast %cst_67 : f32 to vector<1x128xf32>
    %240 = arith.addf %239, %238 : vector<1x128xf32>
    %241 = arith.divf %239, %240 : vector<1x128xf32>
    %242 = arith.mulf %233, %210 : vector<1x128xf32>
    %243 = arith.mulf %227, %235 : vector<1x128xf32>
    %244 = arith.addf %242, %243 : vector<1x128xf32>
    %245 = math.tanh %244 : vector<1x128xf32>
    %246 = arith.mulf %241, %245 : vector<1x128xf32>
    %247 = arith.index_cast %c6_i32 : i32 to index
    %c0_68 = arith.constant 0 : index
    %248 = vector.load %arg11[%247, %c0_68] : memref<8x128xf32, #tpu.memory_space<vmem>>, vector<1x128xf32>
    tpu.vector_store %arg11[%247, %c0_68], %246 {strides = array<i32>} : memref<8x128xf32, #tpu.memory_space<vmem>>, vector<1x128xf32>,
    %c7_i32_69 = arith.constant 7 : i32
    %249 = arith.subi %c7_i32_69, %c6_i32 : i32
    %250 = arith.index_cast %249 : i32 to index
    %c0_70 = arith.constant 0 : index
    %251 = vector.load %arg12[%250, %c0_70] : memref<8x128xf32, #tpu.memory_space<vmem>>, vector<1x128xf32>
    tpu.vector_store %arg12[%250, %c0_70], %246 {strides = array<i32>} : memref<8x128xf32, #tpu.memory_space<vmem>>, vector<1x128xf32>,
    %c7_i32_71 = arith.constant 7 : i32
    %cst_72 = arith.constant dense<0.000000e+00> : vector<1x512xf32>
    %252 = tpu.matmul %246, %11, %cst_72 {dimension_numbers = #tpu.dot_dimension_numbers<[1], [0], [0], [1], [0, 0, 1, 1], [], []>} : vector<1x128xf32>, vector<128x512xf32>, vector<1x512xf32> -> vector<1x512xf32>
    %253 = arith.index_cast %c7_i32_71 : i32 to index
    %c0_73 = arith.constant 0 : index
    %254 = vector.load %arg10[%253, %c0_73] : memref<8x512xf32, #tpu.memory_space<vmem>>, vector<1x512xf32>
    %255 = arith.addf %252, %254 : vector<1x512xf32>
    %256 = vector.extract_strided_slice %255 {offsets = [0, 0], sizes = [1, 128], strides = [1, 1]} : vector<1x512xf32> to vector<1x128xf32>
    %257 = arith.negf %256 : vector<1x128xf32>
    %258 = math.exp %257 : vector<1x128xf32>
    %cst_74 = arith.constant 1.000000e+00 : f32
    %259 = vector.broadcast %cst_74 : f32 to vector<1x128xf32>
    %260 = arith.addf %259, %258 : vector<1x128xf32>
    %261 = arith.divf %259, %260 : vector<1x128xf32>
    %262 = vector.extract_strided_slice %255 {offsets = [0, 128], sizes = [1, 128], strides = [1, 1]} : vector<1x512xf32> to vector<1x128xf32>
    %263 = arith.negf %262 : vector<1x128xf32>
    %264 = math.exp %263 : vector<1x128xf32>
    %cst_75 = arith.constant 1.000000e+00 : f32
    %265 = vector.broadcast %cst_75 : f32 to vector<1x128xf32>
    %266 = arith.addf %265, %264 : vector<1x128xf32>
    %267 = arith.divf %265, %266 : vector<1x128xf32>
    %268 = vector.extract_strided_slice %255 {offsets = [0, 256], sizes = [1, 128], strides = [1, 1]} : vector<1x512xf32> to vector<1x128xf32>
    %269 = math.tanh %268 : vector<1x128xf32>
    %270 = vector.extract_strided_slice %255 {offsets = [0, 384], sizes = [1, 128], strides = [1, 1]} : vector<1x512xf32> to vector<1x128xf32>
    %271 = arith.negf %270 : vector<1x128xf32>
    %272 = math.exp %271 : vector<1x128xf32>
    %cst_76 = arith.constant 1.000000e+00 : f32
    %273 = vector.broadcast %cst_76 : f32 to vector<1x128xf32>
    %274 = arith.addf %273, %272 : vector<1x128xf32>
    %275 = arith.divf %273, %274 : vector<1x128xf32>
    %276 = arith.mulf %267, %244 : vector<1x128xf32>
    %277 = arith.mulf %261, %269 : vector<1x128xf32>
    %278 = arith.addf %276, %277 : vector<1x128xf32>
    %279 = math.tanh %278 : vector<1x128xf32>
    %280 = arith.mulf %275, %279 : vector<1x128xf32>
    %281 = arith.index_cast %c7_i32_71 : i32 to index
    %c0_77 = arith.constant 0 : index
    %282 = vector.load %arg11[%281, %c0_77] : memref<8x128xf32, #tpu.memory_space<vmem>>, vector<1x128xf32>
    tpu.vector_store %arg11[%281, %c0_77], %280 {strides = array<i32>} : memref<8x128xf32, #tpu.memory_space<vmem>>, vector<1x128xf32>,
    %c7_i32_78 = arith.constant 7 : i32
    %283 = arith.subi %c7_i32_78, %c7_i32_71 : i32
    %284 = arith.index_cast %283 : i32 to index
    %c0_79 = arith.constant 0 : index
    %285 = vector.load %arg12[%284, %c0_79] : memref<8x128xf32, #tpu.memory_space<vmem>>, vector<1x128xf32>
    tpu.vector_store %arg12[%284, %c0_79], %280 {strides = array<i32>} : memref<8x128xf32, #tpu.memory_space<vmem>>, vector<1x128xf32>,
    %c8_i32 = arith.constant 8 : i32
    %c0_80 = arith.constant 0 : index
    %c0_81 = arith.constant 0 : index
    %286 = vector.load %arg11[%c0_80, %c0_81] : memref<8x128xf32, #tpu.memory_space<vmem>>, vector<8x128xf32>
    %c0_82 = arith.constant 0 : index
    %c0_83 = arith.constant 0 : index
    %287 = vector.load %arg6[%c0_82, %c0_83] : memref<128x128xf32, #tpu.memory_space<vmem>>, vector<128x128xf32>
    %cst_84 = arith.constant dense<0.000000e+00> : vector<8x128xf32>
    %288 = tpu.matmul %286, %287, %cst_84 {dimension_numbers = #tpu.dot_dimension_numbers<[1], [0], [0], [1], [0, 0, 1, 1], [], []>} : vector<8x128xf32>, vector<128x128xf32>, vector<8x128xf32> -> vector<8x128xf32>
    %c0_85 = arith.constant 0 : index
    %c0_86 = arith.constant 0 : index
    %289 = vector.load %arg12[%c0_85, %c0_86] : memref<8x128xf32, #tpu.memory_space<vmem>>, vector<8x128xf32>
    %c0_87 = arith.constant 0 : index
    %c0_88 = arith.constant 0 : index
    %290 = vector.load %arg7[%c0_87, %c0_88] : memref<128x128xf32, #tpu.memory_space<vmem>>, vector<128x128xf32>
    %cst_89 = arith.constant dense<0.000000e+00> : vector<8x128xf32>
    %291 = tpu.matmul %289, %290, %cst_89 {dimension_numbers = #tpu.dot_dimension_numbers<[1], [0], [0], [1], [0, 0, 1, 1], [], []>} : vector<8x128xf32>, vector<128x128xf32>, vector<8x128xf32> -> vector<8x128xf32>
    %292 = arith.addf %288, %291 : vector<8x128xf32>
    %c0_90 = arith.constant 0 : index
    %c0_91 = arith.constant 0 : index
    %293 = vector.load %arg8[%c0_90, %c0_91] : memref<1x128xf32, #tpu.memory_space<vmem>>, vector<1x128xf32>
    %294 = vector.broadcast %293 : vector<1x128xf32> to vector<8x128xf32>
    %295 = arith.addf %292, %294 : vector<8x128xf32>
    %c0_92 = arith.constant 0 : index
    %c0_93 = arith.constant 0 : index
    %296 = vector.load %arg9[%c0_92, %c0_93] : memref<8x128xf32, #tpu.memory_space<vmem>>, vector<8x128xf32>
    tpu.vector_store %arg9[%c0_92, %c0_93], %295 {strides = array<i32>} : memref<8x128xf32, #tpu.memory_space<vmem>>, vector<8x128xf32>,
    return
  }
}

</mosaic_0001>

<llo_original>
// kernel: tagger_forward.1
$region0: #{tagger_forward.1}
  #allocation0 [shape = 'u32[]', space=smem, size = 0x4, offset = 0x4, fixed_abs, tag = 'smem constant byte address 0x4 - core index']
  #allocation1 [shape = 'u32[144,128]{1,0:T(1,128)}', space=vmem, size = 0x12000, scoped, tag = 'internal scratch']
  #allocation2 [shape = 'f32[8,512]{1,0:T(8,128)}', space=vmem, size = 0x4000, scoped, tag = 'scratch operand']
  #allocation3 [shape = 'f32[8,128]{1,0:T(8,128)}', space=vmem, size = 0x1000, scoped, tag = 'scratch operand']
  #allocation4 [shape = 'f32[8,128]{1,0:T(8,128)}', space=vmem, size = 0x1000, scoped, tag = 'scratch operand']
  %s0 = inlined_call_operand.vmem [shape: f32[8,32], index: 0, kind: input, shape index: {}]
  %s1 = inlined_call_operand.vmem [shape: f32[8,32], index: 1, kind: input, shape index: {}]
  %s2 = inlined_call_operand.vmem [shape: f32[32,512], index: 2, kind: input, shape index: {}]
  %s3 = inlined_call_operand.vmem [shape: f32[32,512], index: 3, kind: input, shape index: {}]
  %s4 = inlined_call_operand.vmem [shape: f32[1,512], index: 4, kind: input, shape index: {}]
  %s5 = inlined_call_operand.vmem [shape: f32[128,512], index: 5, kind: input, shape index: {}]
  %s6 = inlined_call_operand.vmem [shape: f32[128,128], index: 6, kind: input, shape index: {}]
  %s7 = inlined_call_operand.vmem [shape: f32[128,128], index: 7, kind: input, shape index: {}]
  %s8 = inlined_call_operand.vmem [shape: f32[1,128], index: 8, kind: input, shape index: {}]
  %s9 = inlined_call_operand.hbm [shape: f32[8,128], index: 9, kind: output, shape index: {}]
  %s10 = sld [smem:[#allocation0]]
  $region46: #{tagger_forward.1} parent=0
    _
  %s12 = ssub.s32 1, %s10
  %s13 = scalar_select 0, %s12, %s10
  $region1: #{tagger_forward.1} parent=0
    #allocation5 [shape = 'u8[4096]{0}', space=vmem, size = 0x1000, scoped, tag = 'output window, operand 0, single buffered']
    #allocation6 [shape = 's32[1]{0}', space=sflag, size = 0x4, scoped, tag = 'scoped memory for tagger_forward.1']
    %14 = vsyncpa [#allocation6], 0
    // Predicated region
    $region2: #{tagger_forward.1} parent=1 // pred_check
      _
    $region3: #{tagger_forward.1} parent=1 // pred_check_branch
      %16 = sbr.rel (0) target = $region5
    $region4: #{tagger_forward.1} parent=1 // pred_region
      _
    $region5: #{tagger_forward.1} parent=1 // pred_fallthru
      _
    // Predicated region
    $region6: #{tagger_forward.1} parent=1 // pred_check
      _
    $region7: #{tagger_forward.1} parent=1 // pred_check_branch
      %18 = sbr.rel (0) target = $region9
    $region8: #{tagger_forward.1} parent=1 // pred_region
      _
    $region9: #{tagger_forward.1} parent=1 // pred_fallthru
      _
    // Predicated region
    $region10: #{tagger_forward.1} parent=1 // pred_check
      _
    $region11: #{tagger_forward.1} parent=1 // pred_check_branch
      %20 = sbr.rel (0) target = $region13
    $region12: #{tagger_forward.1} parent=1 // pred_region
      _
    $region13: #{tagger_forward.1} parent=1 // pred_fallthru
      _
    // Predicated region
    $region14: #{tagger_forward.1} parent=1 // pred_check
      _
    $region15: #{tagger_forward.1} parent=1 // pred_check_branch
      %22 = sbr.rel (0) target = $region17
    $region16: #{tagger_forward.1} parent=1 // pred_region
      _
    $region17: #{tagger_forward.1} parent=1 // pred_fallthru
      _
    // Predicated region
    $region18: #{tagger_forward.1} parent=1 // pred_check
      _
    $region19: #{tagger_forward.1} parent=1 // pred_check_branch
      %24 = sbr.rel (0) target = $region21
    $region20: #{tagger_forward.1} parent=1 // pred_region
      _
    $region21: #{tagger_forward.1} parent=1 // pred_fallthru
      _
    // Predicated region
    $region22: #{tagger_forward.1} parent=1 // pred_check
      _
    $region23: #{tagger_forward.1} parent=1 // pred_check_branch
      %26 = sbr.rel (0) target = $region25
    $region24: #{tagger_forward.1} parent=1 // pred_region
      _
    $region25: #{tagger_forward.1} parent=1 // pred_fallthru
      _
    // Predicated region
    $region26: #{tagger_forward.1} parent=1 // pred_check
      _
    $region27: #{tagger_forward.1} parent=1 // pred_check_branch
      %28 = sbr.rel (0) target = $region29
    $region28: #{tagger_forward.1} parent=1 // pred_region
      _
    $region29: #{tagger_forward.1} parent=1 // pred_fallthru
      _
    // Predicated region
    $region30: #{tagger_forward.1} parent=1 // pred_check
      _
    $region31: #{tagger_forward.1} parent=1 // pred_check_branch
      %30 = sbr.rel (0) target = $region33
    $region32: #{tagger_forward.1} parent=1 // pred_region
      _
    $region33: #{tagger_forward.1} parent=1 // pred_fallthru
      _
    // Predicated region
    $region34: #{tagger_forward.1} parent=1 // pred_check
      _
    $region35: #{tagger_forward.1} parent=1 // pred_check_branch
      %32 = sbr.rel (0) target = $region37
    $region36: #{tagger_forward.1} parent=1 // pred_region
      _
    $region37: #{tagger_forward.1} parent=1 // pred_fallthru
      _
    %v33 = vld [vmem:[%s0] sm:$0xff]
    %v34 = vld [vmem:[%s2] sm:$0xff]
    %v35 = vld [vmem:[%s2 + $0x8] sm:$0xff]
    %v36 = vld [vmem:[%s2 + $0x10] sm:$0xff]
    %v37 = vld [vmem:[%s2 + $0x18] sm:$0xff]
    %v38 = vld [vmem:[%s2 + $0x20] sm:$0xff]
    %v39 = vld [vmem:[%s2 + $0x28] sm:$0xff]
    %v40 = vld [vmem:[%s2 + $0x30] sm:$0xff]
    %v41 = vld [vmem:[%s2 + $0x38] sm:$0xff]
    %v42 = vld [vmem:[%s2 + $0x40] sm:$0xff]
    %v43 = vld [vmem:[%s2 + $0x48] sm:$0xff]
    %v44 = vld [vmem:[%s2 + $0x50] sm:$0xff]
    %v45 = vld [vmem:[%s2 + $0x58] sm:$0xff]
    %v46 = vld [vmem:[%s2 + $0x60] sm:$0xff]
    %v47 = vld [vmem:[%s2 + $0x68] sm:$0xff]
    %v48 = vld [vmem:[%s2 + $0x70] sm:$0xff]
    %v49 = vld [vmem:[%s2 + $0x78] sm:$0xff]
    %v50 = vld [vmem:[%s1] sm:$0xff]
    %v51 = vld [vmem:[%s3] sm:$0xff]
    %v52 = vld [vmem:[%s3 + $0x8] sm:$0xff]
    %v53 = vld [vmem:[%s3 + $0x10] sm:$0xff]
    %v54 = vld [vmem:[%s3 + $0x18] sm:$0xff]
    %v55 = vld [vmem:[%s3 + $0x20] sm:$0xff]
    %v56 = vld [vmem:[%s3 + $0x28] sm:$0xff]
    %v57 = vld [vmem:[%s3 + $0x30] sm:$0xff]
    %v58 = vld [vmem:[%s3 + $0x38] sm:$0xff]
    %v59 = vld [vmem:[%s3 + $0x40] sm:$0xff]
    %v60 = vld [vmem:[%s3 + $0x48] sm:$0xff]
    %v61 = vld [vmem:[%s3 + $0x50] sm:$0xff]
    %v62 = vld [vmem:[%s3 + $0x58] sm:$0xff]
    %v63 = vld [vmem:[%s3 + $0x60] sm:$0xff]
    %v64 = vld [vmem:[%s3 + $0x68] sm:$0xff]
    %v65 = vld [vmem:[%s3 + $0x70] sm:$0xff]
    %v66 = vld [vmem:[%s3 + $0x78] sm:$0xff]
    %vm67 = vcmask 261120
    %v69 = vsel %vm67, %v50, 0
    %71 = vmatprep.subr.mxu0 0.0
    %72 = vmatpush1.msra.mxu0 0.0
    %73 = vmatprep.subr.mxu0 0.0
    %74 = vmatpush1.msra.mxu0 0.0
    %75 = vmatprep.subr.mxu0 0.0
    %76 = vmatpush1.msra.mxu0 0.0
    %77 = vmatprep.subr.mxu0 0.0
    %78 = vmatpush1.msra.mxu0 0.0
    %79 = vmatprep.subr.mxu0 0.0
    %80 = vmatpush1.msra.mxu0 0.0
    %81 = vmatprep.subr.mxu0 0.0
    %82 = vmatpush1.msra.mxu0 0.0
    %83 = vmatprep.subr.mxu0 0.0
    %84 = vmatpush1.msra.mxu0 0.0
    %85 = vmatprep.subr.mxu0 0.0
    %86 = vmatpush1.msra.mxu0 0.0
    %87 = vmatprep.subr.mxu0 0.0
    %88 = vmatpush1.msra.mxu0 0.0
    %89 = vmatprep.subr.mxu0 0.0
    %90 = vmatpush1.msra.mxu0 0.0
    %91 = vmatprep.subr.mxu0 0.0
    %92 = vmatpush1.msra.mxu0 0.0
    %93 = vmatprep.subr.mxu0 0.0
    %94 = vmatpush1.msra.mxu0 0.0
    %95 = vmatprep.subr.mxu0 %v64
    %96 = vmatpush1.msra.mxu0 %v63
    %97 = vmatprep.subr.mxu0 %v60
    %98 = vmatpush1.msra.mxu0 %v59
    %99 = vmatprep.subr.mxu0 %v56
    %100 = vmatpush1.msra.mxu0 %v55
    %101 = vmatprep.subr.mxu0 %v52
    %102 = vmatpush1.msra.mxu0 %v51
    %103 = vmatprep.subr.mxu0 0.0
    %104 = vmatpush2.msra.mxu0 0.0
    %105 = vmatprep.subr.mxu0 0.0
    %106 = vmatpush2.msra.mxu0 0.0
    %107 = vmatprep.subr.mxu0 0.0
    %108 = vmatpush2.msra.mxu0 0.0
    %109 = vmatprep.subr.mxu0 0.0
    %110 = vmatpush2.msra.mxu0 0.0
    %111 = vmatprep.subr.mxu0 0.0
    %112 = vmatpush2.msra.mxu0 0.0
    %113 = vmatprep.subr.mxu0 0.0
    %114 = vmatpush2.msra.mxu0 0.0
    %115 = vmatprep.subr.mxu0 0.0
    %116 = vmatpush2.msra.mxu0 0.0
    %117 = vmatprep.subr.mxu0 0.0
    %118 = vmatpush2.msra.mxu0 0.0
    %119 = vmatprep.subr.mxu0 0.0
    %120 = vmatpush2.msra.mxu0 0.0
    %121 = vmatprep.subr.mxu0 0.0
    %122 = vmatpush2.msra.mxu0 0.0
    %123 = vmatprep.subr.mxu0 0.0
    %124 = vmatpush2.msra.mxu0 0.0
    %125 = vmatprep.subr.mxu0 0.0
    %126 = vmatpush2.msra.mxu0 0.0
    %127 = vmatprep.subr.mxu0 0.0
    %128 = vmatpush2.msra.mxu0 0.0
    %129 = vmatprep.subr.mxu0 0.0
    %130 = vmatpush2.msra.mxu0 0.0
    %131 = vmatprep.subr.mxu0 0.0
    %132 = vmatpush2.msra.mxu0 0.0
    %133 = vmatprep.subr.mxu0 0.0
    %134 = vmatpush2.msra.mxu0 0.0
    %135 = vmatprep.mubr.f32.mxu0 0.0
    %136 = vmatmul.mubr.f32.gmra.mxu0 %v69
    %v137 = vpop.f32.mrf.mxu0
    %v138 = vadd.f32 0.0, %v137
    %v139 = vpop.f32.mrf.mxu0
    %v140 = vadd.f32 0.0, %v139
    %141 = vdwg.mxu0
    %142 = vmatprep.subr.mxu0 0.0
    %143 = vmatpush1.msra.mxu0 0.0
    %144 = vmatprep.subr.mxu0 0.0
    %145 = vmatpush1.msra.mxu0 0.0
    %146 = vmatprep.subr.mxu0 0.0
    %147 = vmatpush1.msra.mxu0 0.0
    %148 = vmatprep.subr.mxu0 0.0
    %149 = vmatpush1.msra.mxu0 0.0
    %150 = vmatprep.subr.mxu0 0.0
    %151 = vmatpush1.msra.mxu0 0.0
    %152 = vmatprep.subr.mxu0 0.0
    %153 = vmatpush1.msra.mxu0 0.0
    %154 = vmatprep.subr.mxu0 0.0
    %155 = vmatpush1.msra.mxu0 0.0
    %156 = vmatprep.subr.mxu0 0.0
    %157 = vmatpush1.msra.mxu0 0.0
    %158 = vmatprep.subr.mxu0 0.0
    %159 = vmatpush1.msra.mxu0 0.0
    %160 = vmatprep.subr.mxu0 0.0
    %161 = vmatpush1.msra.mxu0 0.0
    %162 = vmatprep.subr.mxu0 0.0
    %163 = vmatpush1.msra.mxu0 0.0
    %164 = vmatprep.subr.mxu0 0.0
    %165 = vmatpush1.msra.mxu0 0.0
    %166 = vmatprep.subr.mxu0 %v66
    %167 = vmatpush1.msra.mxu0 %v65
    %168 = vmatprep.subr.mxu0 %v62
    %169 = vmatpush1.msra.mxu0 %v61
    %170 = vmatprep.subr.mxu0 %v58
    %171 = vmatpush1.msra.mxu0 %v57
    %172 = vmatprep.subr.mxu0 %v54
    %173 = vmatpush1.msra.mxu0 %v53
    %174 = vmatprep.subr.mxu0 0.0
    %175 = vmatpush2.msra.mxu0 0.0
    %176 = vmatprep.subr.mxu0 0.0
    %177 = vmatpush2.msra.mxu0 0.0
    %178 = vmatprep.subr.mxu0 0.0
    %179 = vmatpush2.msra.mxu0 0.0
    %180 = vmatprep.subr.mxu0 0.0
    %181 = vmatpush2.msra.mxu0 0.0
    %182 = vmatprep.subr.mxu0 0.0
    %183 = vmatpush2.msra.mxu0 0.0
    %184 = vmatprep.subr.mxu0 0.0
    %185 = vmatpush2.msra.mxu0 0.0
    %186 = vmatprep.subr.mxu0 0.0
    %187 = vmatpush2.msra.mxu0 0.0
    %188 = vmatprep.subr.mxu0 0.0
    %189 = vmatpush2.msra.mxu0 0.0
    %190 = vmatprep.subr.mxu0 0.0
    %191 = vmatpush2.msra.mxu0 0.0
    %192 = vmatprep.subr.mxu0 0.0
    %193 = vmatpush2.msra.mxu0 0.0
    %194 = vmatprep.subr.mxu0 0.0
    %195 = vmatpush2.msra.mxu0 0.0
    %196 = vmatprep.subr.mxu0 0.0
    %197 = vmatpush2.msra.mxu0 0.0
    %198 = vmatprep.subr.mxu0 0.0
    %199 = vmatpush2.msra.mxu0 0.0
    %200 = vmatprep.subr.mxu0 0.0
    %201 = vmatpush2.msra.mxu0 0.0
    %202 = vmatprep.subr.mxu0 0.0
    %203 = vmatpush2.msra.mxu0 0.0
    %204 = vmatprep.subr.mxu0 0.0
    %205 = vmatpush2.msra.mxu0 0.0
    %206 = vmatprep.mubr.f32.mxu0 0.0
    %207 = vmatmul.mubr.f32.gmra.mxu0 %v69
    %v208 = vpop.f32.mrf.mxu0
    %v209 = vadd.f32 0.0, %v208
    %v210 = vpop.f32.mrf.mxu0
    %v211 = vadd.f32 0.0, %v210
    %212 = vdwg.mxu0
    %v214 = vsel %vm67, %v33, 0
    %216 = vmatprep.subr.mxu0 0.0
    %217 = vmatpush1.msra.mxu0 0.0
    %218 = vmatprep.subr.mxu0 0.0
    %219 = vmatpush1.msra.mxu0 0.0
    %220 = vmatprep.subr.mxu0 0.0
    %221 = vmatpush1.msra.mxu0 0.0
    %222 = vmatprep.subr.mxu0 0.0
    %223 = vmatpush1.msra.mxu0 0.0
    %224 = vmatprep.subr.mxu0 0.0
    %225 = vmatpush1.msra.mxu0 0.0
    %226 = vmatprep.subr.mxu0 0.0
    %227 = vmatpush1.msra.mxu0 0.0
    %228 = vmatprep.subr.mxu0 0.0
    %229 = vmatpush1.msra.mxu0 0.0
    %230 = vmatprep.subr.mxu0 0.0
    %231 = vmatpush1.msra.mxu0 0.0
    %232 = vmatprep.subr.mxu0 0.0
    %233 = vmatpush1.msra.mxu0 0.0
    %234 = vmatprep.subr.mxu0 0.0
    %235 = vmatpush1.msra.mxu0 0.0
    %236 = vmatprep.subr.mxu0 0.0
    %237 = vmatpush1.msra.mxu0 0.0
    %238 = vmatprep.subr.mxu0 0.0
    %239 = vmatpush1.msra.mxu0 0.0
    %240 = vmatprep.subr.mxu0 %v47
    %241 = vmatpush1.msra.mxu0 %v46
    %242 = vmatprep.subr.mxu0 %v43
    %243 = vmatpush1.msra.mxu0 %v42
    %244 = vmatprep.subr.mxu0 %v39
    %245 = vmatpush1.msra.mxu0 %v38
    %246 = vmatprep.subr.mxu0 %v35
    %247 = vmatpush1.msra.mxu0 %v34
    %248 = vmatprep.subr.mxu0 0.0
    %249 = vmatpush2.msra.mxu0 0.0
    %250 = vmatprep.subr.mxu0 0.0
    %251 = vmatpush2.msra.mxu0 0.0
    %252 = vmatprep.subr.mxu0 0.0
    %253 = vmatpush2.msra.mxu0 0.0
    %254 = vmatprep.subr.mxu0 0.0
    %255 = vmatpush2.msra.mxu0 0.0
    %256 = vmatprep.subr.mxu0 0.0
    %257 = vmatpush2.msra.mxu0 0.0
    %258 = vmatprep.subr.mxu0 0.0
    %259 = vmatpush2.msra.mxu0 0.0
    %260 = vmatprep.subr.mxu0 0.0
    %261 = vmatpush2.msra.mxu0 0.0
    %262 = vmatprep.subr.mxu0 0.0
    %263 = vmatpush2.msra.mxu0 0.0
    %264 = vmatprep.subr.mxu0 0.0
    %265 = vmatpush2.msra.mxu0 0.0
    %266 = vmatprep.subr.mxu0 0.0
    %267 = vmatpush2.msra.mxu0 0.0
    %268 = vmatprep.subr.mxu0 0.0
    %269 = vmatpush2.msra.mxu0 0.0
    %270 = vmatprep.subr.mxu0 0.0
    %271 = vmatpush2.msra.mxu0 0.0
    %272 = vmatprep.subr.mxu0 0.0
    %273 = vmatpush2.msra.mxu0 0.0
    %274 = vmatprep.subr.mxu0 0.0
    %275 = vmatpush2.msra.mxu0 0.0
    %276 = vmatprep.subr.mxu0 0.0
    %277 = vmatpush2.msra.mxu0 0.0
    %278 = vmatprep.subr.mxu0 0.0
    %279 = vmatpush2.msra.mxu0 0.0
    %280 = vmatprep.mubr.f32.mxu0 0.0
    %281 = vmatmul.mubr.f32.gmra.mxu0 %v214
    %v282 = vpop.f32.mrf.mxu0
    %v283 = vadd.f32 %v138, %v282
    %v284 = vpop.f32.mrf.mxu0
    %v285 = vadd.f32 %v140, %v284
    %286 = vdwg.mxu0
    %287 = vmatprep.subr.mxu0 0.0
    %288 = vmatpush1.msra.mxu0 0.0
    %289 = vmatprep.subr.mxu0 0.0
    %290 = vmatpush1.msra.mxu0 0.0
    %291 = vmatprep.subr.mxu0 0.0
    %292 = vmatpush1.msra.mxu0 0.0
    %293 = vmatprep.subr.mxu0 0.0
    %294 = vmatpush1.msra.mxu0 0.0
    %295 = vmatprep.subr.mxu0 0.0
    %296 = vmatpush1.msra.mxu0 0.0
    %297 = vmatprep.subr.mxu0 0.0
    %298 = vmatpush1.msra.mxu0 0.0
    %299 = vmatprep.subr.mxu0 0.0
    %300 = vmatpush1.msra.mxu0 0.0
    %301 = vmatprep.subr.mxu0 0.0
    %302 = vmatpush1.msra.mxu0 0.0
    %303 = vmatprep.subr.mxu0 0.0
    %304 = vmatpush1.msra.mxu0 0.0
    %305 = vmatprep.subr.mxu0 0.0
    %306 = vmatpush1.msra.mxu0 0.0
    %307 = vmatprep.subr.mxu0 0.0
    %308 = vmatpush1.msra.mxu0 0.0
    %309 = vmatprep.subr.mxu0 0.0
    %310 = vmatpush1.msra.mxu0 0.0
    %311 = vmatprep.subr.mxu0 %v49
    %312 = vmatpush1.msra.mxu0 %v48
    %313 = vmatprep.subr.mxu0 %v45
    %314 = vmatpush1.msra.mxu0 %v44
    %315 = vmatprep.subr.mxu0 %v41
    %316 = vmatpush1.msra.mxu0 %v40
    %317 = vmatprep.subr.mxu0 %v37
    %318 = vmatpush1.msra.mxu0 %v36
    %319 = vmatprep.subr.mxu0 0.0
    %320 = vmatpush2.msra.mxu0 0.0
    %321 = vmatprep.subr.mxu0 0.0
    %322 = vmatpush2.msra.mxu0 0.0
    %323 = vmatprep.subr.mxu0 0.0
    %324 = vmatpush2.msra.mxu0 0.0
    %325 = vmatprep.subr.mxu0 0.0
    %326 = vmatpush2.msra.mxu0 0.0
    %327 = vmatprep.subr.mxu0 0.0
    %328 = vmatpush2.msra.mxu0 0.0
    %329 = vmatprep.subr.mxu0 0.0
    %330 = vmatpush2.msra.mxu0 0.0
    %331 = vmatprep.subr.mxu0 0.0
    %332 = vmatpush2.msra.mxu0 0.0
    %333 = vmatprep.subr.mxu0 0.0
    %334 = vmatpush2.msra.mxu0 0.0
    %335 = vmatprep.subr.mxu0 0.0
    %336 = vmatpush2.msra.mxu0 0.0
    %337 = vmatprep.subr.mxu0 0.0
    %338 = vmatpush2.msra.mxu0 0.0
    %339 = vmatprep.subr.mxu0 0.0
    %340 = vmatpush2.msra.mxu0 0.0
    %341 = vmatprep.subr.mxu0 0.0
    %342 = vmatpush2.msra.mxu0 0.0
    %343 = vmatprep.subr.mxu0 0.0
    %344 = vmatpush2.msra.mxu0 0.0
    %345 = vmatprep.subr.mxu0 0.0
    %346 = vmatpush2.msra.mxu0 0.0
    %347 = vmatprep.subr.mxu0 0.0
    %348 = vmatpush2.msra.mxu0 0.0
    %349 = vmatprep.subr.mxu0 0.0
    %350 = vmatpush2.msra.mxu0 0.0
    %351 = vmatprep.mubr.f32.mxu0 0.0
    %352 = vmatmul.mubr.f32.gmra.mxu0 %v214
    %v353 = vpop.f32.mrf.mxu0
    %v354 = vadd.f32 %v209, %v353
    %v355 = vpop.f32.mrf.mxu0
    %v356 = vadd.f32 %v211, %v355
    %357 = vdwg.mxu0
    %v358 = vld [vmem:[%s4] sm:$0xf]
    %v360 = vlaneseq
    %v361 = vshrl.u32 %v360, 7
    %v362 = vsub.s32 0, %v361
    %v363 = vrot.slane %v358, %v362
    %v364 = vlaneseq
    %v365 = vshrl.u32 %v364, 7
    %v366 = vsub.s32 1, %v365
    %v367 = vrot.slane %v358, %v366
    %v368 = vlaneseq
    %v369 = vshrl.u32 %v368, 7
    %v370 = vsub.s32 2, %v369
    %v371 = vrot.slane %v358, %v370
    %v372 = vlaneseq
    %v373 = vshrl.u32 %v372, 7
    %v374 = vsub.s32 3, %v373
    %v375 = vrot.slane %v358, %v374
    %v380 = vadd.f32 %v283, %v363
    %v381 = vadd.f32 %v285, %v367
    %v382 = vadd.f32 %v354, %v371
    %v383 = vadd.f32 %v356, %v375
    %384 = vst [vmem:[#allocation2] sm:$0xff] %v380
    %385 = vst [vmem:[#allocation2 + $0x8] sm:$0xff] %v381
    %386 = vst [vmem:[#allocation2 + $0x10] sm:$0xff] %v382
    %387 = vst [vmem:[#allocation2 + $0x18] sm:$0xff] %v383
    %v388 = vld [vmem:[%s5] sm:$0xff]
    %v389 = vld [vmem:[%s5 + $0x8] sm:$0xff]
    %v390 = vld [vmem:[%s5 + $0x10] sm:$0xff]
    %v391 = vld [vmem:[%s5 + $0x18] sm:$0xff]
    %v392 = vld [vmem:[%s5 + $0x20] sm:$0xff]
    %v393 = vld [vmem:[%s5 + $0x28] sm:$0xff]
    %v394 = vld [vmem:[%s5 + $0x30] sm:$0xff]
    %v395 = vld [vmem:[%s5 + $0x38] sm:$0xff]
    %v396 = vld [vmem:[%s5 + $0x40] sm:$0xff]
    %v397 = vld [vmem:[%s5 + $0x48] sm:$0xff]
    %v398 = vld [vmem:[%s5 + $0x50] sm:$0xff]
    %v399 = vld [vmem:[%s5 + $0x58] sm:$0xff]
    %v400 = vld [vmem:[%s5 + $0x60] sm:$0xff]
    %v401 = vld [vmem:[%s5 + $0x68] sm:$0xff]
    %v402 = vld [vmem:[%s5 + $0x70] sm:$0xff]
    %v403 = vld [vmem:[%s5 + $0x78] sm:$0xff]
    %v404 = vld [vmem:[%s5 + $0x80] sm:$0xff]
    %v405 = vld [vmem:[%s5 + $0x88] sm:$0xff]
    %v406 = vld [vmem:[%s5 + $0x90] sm:$0xff]
    %v407 = vld [vmem:[%s5 + $0x98] sm:$0xff]
    %v408 = vld [vmem:[%s5 + $0xa0] sm:$0xff]
    %v409 = vld [vmem:[%s5 + $0xa8] sm:$0xff]
    %v410 = vld [vmem:[%s5 + $0xb0] sm:$0xff]
    %v411 = vld [vmem:[%s5 + $0xb8] sm:$0xff]
    %v412 = vld [vmem:[%s5 + $0xc0] sm:$0xff]
    %v413 = vld [vmem:[%s5 + $0xc8] sm:$0xff]
    %v414 = vld [vmem:[%s5 + $0xd0] sm:$0xff]
    %v415 = vld [vmem:[%s5 + $0xd8] sm:$0xff]
    %v416 = vld [vmem:[%s5 + $0xe0] sm:$0xff]
    %v417 = vld [vmem:[%s5 + $0xe8] sm:$0xff]
    %v418 = vld [vmem:[%s5 + $0xf0] sm:$0xff]
    %v419 = vld [vmem:[%s5 + $0xf8] sm:$0xff]
    %v420 = vld [vmem:[%s5 + $0x100] sm:$0xff]
    %v421 = vld [vmem:[%s5 + $0x108] sm:$0xff]
    %v422 = vld [vmem:[%s5 + $0x110] sm:$0xff]
    %v423 = vld [vmem:[%s5 + $0x118] sm:$0xff]
    %v424 = vld [vmem:[%s5 + $0x120] sm:$0xff]
    %v425 = vld [vmem:[%s5 + $0x128] sm:$0xff]
    %v426 = vld [vmem:[%s5 + $0x130] sm:$0xff]
    %v427 = vld [vmem:[%s5 + $0x138] sm:$0xff]
    %v428 = vld [vmem:[%s5 + $0x140] sm:$0xff]
    %v429 = vld [vmem:[%s5 + $0x148] sm:$0xff]
    %v430 = vld [vmem:[%s5 + $0x150] sm:$0xff]
    %v431 = vld [vmem:[%s5 + $0x158] sm:$0xff]
    %v432 = vld [vmem:[%s5 + $0x160] sm:$0xff]
    %v433 = vld [vmem:[%s5 + $0x168] sm:$0xff]
    %v434 = vld [vmem:[%s5 + $0x170] sm:$0xff]
    %v435 = vld [vmem:[%s5 + $0x178] sm:$0xff]
    %v436 = vld [vmem:[%s5 + $0x180] sm:$0xff]
    %v437 = vld [vmem:[%s5 + $0x188] sm:$0xff]
    %v438 = vld [vmem:[%s5 + $0x190] sm:$0xff]
    %v439 = vld [vmem:[%s5 + $0x198] sm:$0xff]
    %v440 = vld [vmem:[%s5 + $0x1a0] sm:$0xff]
    %v441 = vld [vmem:[%s5 + $0x1a8] sm:$0xff]
    %v442 = vld [vmem:[%s5 + $0x1b0] sm:$0xff]
    %v443 = vld [vmem:[%s5 + $0x1b8] sm:$0xff]
    %v444 = vld [vmem:[%s5 + $0x1c0] sm:$0xff]
    %v445 = vld [vmem:[%s5 + $0x1c8] sm:$0xff]
    %v446 = vld [vmem:[%s5 + $0x1d0] sm:$0xff]
    %v447 = vld [vmem:[%s5 + $0x1d8] sm:$0xff]
    %v448 = vld [vmem:[%s5 + $0x1e0] sm:$0xff]
    %v449 = vld [vmem:[%s5 + $0x1e8] sm:$0xff]
    %v450 = vld [vmem:[%s5 + $0x1f0] sm:$0xff]
    %v451 = vld [vmem:[%s5 + $0x1f8] sm:$0xff]
    %v452 = vld [vmem:[#allocation2] ss:$8 sm:$0xf]
    %v454 = vlaneseq
    %v455 = vshrl.u32 %v454, 7
    %v456 = vsub.s32 0, %v455
    %v457 = vrot.slane %v452, %v456
    %v458 = vlaneseq
    %v459 = vshrl.u32 %v458, 7
    %v460 = vsub.s32 1, %v459
    %v461 = vrot.slane %v452, %v460
    %v462 = vlaneseq
    %v463 = vshrl.u32 %v462, 7
    %v464 = vsub.s32 2, %v463
    %v465 = vrot.slane %v452, %v464
    %v466 = vlaneseq
    %v467 = vshrl.u32 %v466, 7
    %v468 = vsub.s32 3, %v467
    %v469 = vrot.slane %v452, %v468
    %474 = vmatprep.subr.mxu0 %v449
    %475 = vmatpush1.msra.mxu0 %v448
    %476 = vmatprep.subr.mxu0 %v445
    %477 = vmatpush1.msra.mxu0 %v444
    %478 = vmatprep.subr.mxu0 %v441
    %479 = vmatpush1.msra.mxu0 %v440
    %480 = vmatprep.subr.mxu0 %v437
    %481 = vmatpush1.msra.mxu0 %v436
    %482 = vmatprep.subr.mxu0 %v433
    %483 = vmatpush1.msra.mxu0 %v432
    %484 = vmatprep.subr.mxu0 %v429
    %485 = vmatpush1.msra.mxu0 %v428
    %486 = vmatprep.subr.mxu0 %v425
    %487 = vmatpush1.msra.mxu0 %v424
    %488 = vmatprep.subr.mxu0 %v421
    %489 = vmatpush1.msra.mxu0 %v420
    %490 = vmatprep.subr.mxu0 %v417
    %491 = vmatpush1.msra.mxu0 %v416
    %492 = vmatprep.subr.mxu0 %v413
    %493 = vmatpush1.msra.mxu0 %v412
    %494 = vmatprep.subr.mxu0 %v409
    %495 = vmatpush1.msra.mxu0 %v408
    %496 = vmatprep.subr.mxu0 %v405
    %497 = vmatpush1.msra.mxu0 %v404
    %498 = vmatprep.subr.mxu0 %v401
    %499 = vmatpush1.msra.mxu0 %v400
    %500 = vmatprep.subr.mxu0 %v397
    %501 = vmatpush1.msra.mxu0 %v396
    %502 = vmatprep.subr.mxu0 %v393
    %503 = vmatpush1.msra.mxu0 %v392
    %504 = vmatprep.subr.mxu0 %v389
    %505 = vmatpush1.msra.mxu0 %v388
    %506 = vmatprep.subr.mxu0 0.0
    %507 = vmatpush2.msra.mxu0 0.0
    %508 = vmatprep.subr.mxu0 0.0
    %509 = vmatpush2.msra.mxu0 0.0
    %510 = vmatprep.subr.mxu0 0.0
    %511 = vmatpush2.msra.mxu0 0.0
    %512 = vmatprep.subr.mxu0 0.0
    %513 = vmatpush2.msra.mxu0 0.0
    %514 = vmatprep.subr.mxu0 0.0
    %515 = vmatpush2.msra.mxu0 0.0
    %516 = vmatprep.subr.mxu0 0.0
    %517 = vmatpush2.msra.mxu0 0.0
    %518 = vmatprep.subr.mxu0 0.0
    %519 = vmatpush2.msra.mxu0 0.0
    %520 = vmatprep.subr.mxu0 0.0
    %521 = vmatpush2.msra.mxu0 0.0
    %522 = vmatprep.subr.mxu0 0.0
    %523 = vmatpush2.msra.mxu0 0.0
    %524 = vmatprep.subr.mxu0 0.0
    %525 = vmatpush2.msra.mxu0 0.0
    %526 = vmatprep.subr.mxu0 0.0
    %527 = vmatpush2.msra.mxu0 0.0
    %528 = vmatprep.subr.mxu0 0.0
    %529 = vmatpush2.msra.mxu0 0.0
    %530 = vmatprep.subr.mxu0 0.0
    %531 = vmatpush2.msra.mxu0 0.0
    %532 = vmatprep.subr.mxu0 0.0
    %533 = vmatpush2.msra.mxu0 0.0
    %534 = vmatprep.subr.mxu0 0.0
    %535 = vmatpush2.msra.mxu0 0.0
    %536 = vmatprep.subr.mxu0 0.0
    %537 = vmatpush2.msra.mxu0 0.0
    %538 = vmatprep.mubr.f32.mxu0 0.0
    %539 = vmatmul.mubr.f32.gmra.mxu0 0.0
    %v540 = vpop.f32.mrf.mxu0
    %v541 = vadd.f32 %v457, %v540
    %v542 = vpop.f32.mrf.mxu0
    %v543 = vadd.f32 %v461, %v542
    %544 = vdwg.mxu0
    %545 = vmatprep.subr.mxu0 %v451
    %546 = vmatpush1.msra.mxu0 %v450
    %547 = vmatprep.subr.mxu0 %v447
    %548 = vmatpush1.msra.mxu0 %v446
    %549 = vmatprep.subr.mxu0 %v443
    %550 = vmatpush1.msra.mxu0 %v442
    %551 = vmatprep.subr.mxu0 %v439
    %552 = vmatpush1.msra.mxu0 %v438
    %553 = vmatprep.subr.mxu0 %v435
    %554 = vmatpush1.msra.mxu0 %v434
    %555 = vmatprep.subr.mxu0 %v431
    %556 = vmatpush1.msra.mxu0 %v430
    %557 = vmatprep.subr.mxu0 %v427
    %558 = vmatpush1.msra.mxu0 %v426
    %559 = vmatprep.subr.mxu0 %v423
    %560 = vmatpush1.msra.mxu0 %v422
    %561 = vmatprep.subr.mxu0 %v419
    %562 = vmatpush1.msra.mxu0 %v418
    %563 = vmatprep.subr.mxu0 %v415
    %564 = vmatpush1.msra.mxu0 %v414
    %565 = vmatprep.subr.mxu0 %v411
    %566 = vmatpush1.msra.mxu0 %v410
    %567 = vmatprep.subr.mxu0 %v407
    %568 = vmatpush1.msra.mxu0 %v406
    %569 = vmatprep.subr.mxu0 %v403
    %570 = vmatpush1.msra.mxu0 %v402
    %571 = vmatprep.subr.mxu0 %v399
    %572 = vmatpush1.msra.mxu0 %v398
    %573 = vmatprep.subr.mxu0 %v395
    %574 = vmatpush1.msra.mxu0 %v394
    %575 = vmatprep.subr.mxu0 %v391
    %576 = vmatpush1.msra.mxu0 %v390
    %577 = vmatprep.subr.mxu0 0.0
    %578 = vmatpush2.msra.mxu0 0.0
    %579 = vmatprep.subr.mxu0 0.0
    %580 = vmatpush2.msra.mxu0 0.0
    %581 = vmatprep.subr.mxu0 0.0
    %582 = vmatpush2.msra.mxu0 0.0
    %583 = vmatprep.subr.mxu0 0.0
    %584 = vmatpush2.msra.mxu0 0.0
    %585 = vmatprep.subr.mxu0 0.0
    %586 = vmatpush2.msra.mxu0 0.0
    %587 = vmatprep.subr.mxu0 0.0
    %588 = vmatpush2.msra.mxu0 0.0
    %589 = vmatprep.subr.mxu0 0.0
    %590 = vmatpush2.msra.mxu0 0.0
    %591 = vmatprep.subr.mxu0 0.0
    %592 = vmatpush2.msra.mxu0 0.0
    %593 = vmatprep.subr.mxu0 0.0
    %594 = vmatpush2.msra.mxu0 0.0
    %595 = vmatprep.subr.mxu0 0.0
    %596 = vmatpush2.msra.mxu0 0.0
    %597 = vmatprep.subr.mxu0 0.0
    %598 = vmatpush2.msra.mxu0 0.0
    %599 = vmatprep.subr.mxu0 0.0
    %600 = vmatpush2.msra.mxu0 0.0
    %601 = vmatprep.subr.mxu0 0.0
    %602 = vmatpush2.msra.mxu0 0.0
    %603 = vmatprep.subr.mxu0 0.0
    %604 = vmatpush2.msra.mxu0 0.0
    %605 = vmatprep.subr.mxu0 0.0
    %606 = vmatpush2.msra.mxu0 0.0
    %607 = vmatprep.subr.mxu0 0.0
    %608 = vmatpush2.msra.mxu0 0.0
    %609 = vmatprep.mubr.f32.mxu0 0.0
    %610 = vmatmul.mubr.f32.gmra.mxu0 0.0
    %v611 = vpop.f32.mrf.mxu0
    %v612 = vadd.f32 %v465, %v611
    %v613 = vpop.f32.mrf.mxu0
    %v614 = vadd.f32 %v469, %v613
    %615 = vdwg.mxu0
    %v616 = vxor.u32 %v541, 2147483648
    %v617 = vmul.f32 %v616, 1.442695
    %v618 = vpow.pop %v617
    %v619 = vadd.f32 %v618, 1.0
    %v620 = vrcp.pop %v619
    %v621 = vmul.f32 1.0, %v620
    %v622 = vxor.u32 %v543, 2147483648
    %v623 = vmul.f32 %v622, 1.442695
    %v624 = vpow.pop %v623
    %v625 = vadd.f32 %v624, 1.0
    %v626 = vrcp.pop %v625
    %v627 = vmul.f32 1.0, %v626
    %v628 = vtanh.pop %v612
    %v629 = vxor.u32 %v614, 2147483648
    %v630 = vmul.f32 %v629, 1.442695
    %v631 = vpow.pop %v630
    %v632 = vadd.f32 %v631, 1.0
    %v633 = vrcp.pop %v632
    %v634 = vmul.f32 1.0, %v633
    %v635 = vmul.f32 %v627, 0.0
    %v636 = vmul.f32 %v621, %v628
    %v637 = vadd.f32 %v635, %v636
    %v638 = vtanh.pop %v637
    %v639 = vmul.f32 %v634, %v638
    %640 = vst [vmem:[#allocation3] sm:$0x1] %v639
    %641 = vst [vmem:[#allocation4 + $0x7] sm:$0x1] %v639
    %s642 = scalar_lea.vmem [#allocation2], 1
    %v643 = vld [vmem:[%s642] ss:$8 sm:$0xf]
    %v645 = vlaneseq
    %v646 = vshrl.u32 %v645, 7
    %v647 = vsub.s32 0, %v646
    %v648 = vrot.slane %v643, %v647
    %v649 = vlaneseq
    %v650 = vshrl.u32 %v649, 7
    %v651 = vsub.s32 1, %v650
    %v652 = vrot.slane %v643, %v651
    %v653 = vlaneseq
    %v654 = vshrl.u32 %v653, 7
    %v655 = vsub.s32 2, %v654
    %v656 = vrot.slane %v643, %v655
    %v657 = vlaneseq
    %v658 = vshrl.u32 %v657, 7
    %v659 = vsub.s32 3, %v658
    %v660 = vrot.slane %v643, %v659
    %665 = vmatprep.subr.mxu0 %v449
    %666 = vmatpush1.msra.mxu0 %v448
    %667 = vmatprep.subr.mxu0 %v445
    %668 = vmatpush1.msra.mxu0 %v444
    %669 = vmatprep.subr.mxu0 %v441
    %670 = vmatpush1.msra.mxu0 %v440
    %671 = vmatprep.subr.mxu0 %v437
    %672 = vmatpush1.msra.mxu0 %v436
    %673 = vmatprep.subr.mxu0 %v433
    %674 = vmatpush1.msra.mxu0 %v432
    %675 = vmatprep.subr.mxu0 %v429
    %676 = vmatpush1.msra.mxu0 %v428
    %677 = vmatprep.subr.mxu0 %v425
    %678 = vmatpush1.msra.mxu0 %v424
    %679 = vmatprep.subr.mxu0 %v421
    %680 = vmatpush1.msra.mxu0 %v420
    %681 = vmatprep.subr.mxu0 %v417
    %682 = vmatpush1.msra.mxu0 %v416
    %683 = vmatprep.subr.mxu0 %v413
    %684 = vmatpush1.msra.mxu0 %v412
    %685 = vmatprep.subr.mxu0 %v409
    %686 = vmatpush1.msra.mxu0 %v408
    %687 = vmatprep.subr.mxu0 %v405
    %688 = vmatpush1.msra.mxu0 %v404
    %689 = vmatprep.subr.mxu0 %v401
    %690 = vmatpush1.msra.mxu0 %v400
    %691 = vmatprep.subr.mxu0 %v397
    %692 = vmatpush1.msra.mxu0 %v396
    %693 = vmatprep.subr.mxu0 %v393
    %694 = vmatpush1.msra.mxu0 %v392
    %695 = vmatprep.subr.mxu0 %v389
    %696 = vmatpush1.msra.mxu0 %v388
    %697 = vmatprep.subr.mxu0 0.0
    %698 = vmatpush2.msra.mxu0 0.0
    %699 = vmatprep.subr.mxu0 0.0
    %700 = vmatpush2.msra.mxu0 0.0
    %701 = vmatprep.subr.mxu0 0.0
    %702 = vmatpush2.msra.mxu0 0.0
    %703 = vmatprep.subr.mxu0 0.0
    %704 = vmatpush2.msra.mxu0 0.0
    %705 = vmatprep.subr.mxu0 0.0
    %706 = vmatpush2.msra.mxu0 0.0
    %707 = vmatprep.subr.mxu0 0.0
    %708 = vmatpush2.msra.mxu0 0.0
    %709 = vmatprep.subr.mxu0 0.0
    %710 = vmatpush2.msra.mxu0 0.0
    %711 = vmatprep.subr.mxu0 0.0
    %712 = vmatpush2.msra.mxu0 0.0
    %713 = vmatprep.subr.mxu0 0.0
    %714 = vmatpush2.msra.mxu0 0.0
    %715 = vmatprep.subr.mxu0 0.0
    %716 = vmatpush2.msra.mxu0 0.0
    %717 = vmatprep.subr.mxu0 0.0
    %718 = vmatpush2.msra.mxu0 0.0
    %719 = vmatprep.subr.mxu0 0.0
    %720 = vmatpush2.msra.mxu0 0.0
    %721 = vmatprep.subr.mxu0 0.0
    %722 = vmatpush2.msra.mxu0 0.0
    %723 = vmatprep.subr.mxu0 0.0
    %724 = vmatpush2.msra.mxu0 0.0
    %725 = vmatprep.subr.mxu0 0.0
    %726 = vmatpush2.msra.mxu0 0.0
    %727 = vmatprep.subr.mxu0 0.0
    %728 = vmatpush2.msra.mxu0 0.0
    %729 = vmatprep.mubr.f32.mxu0 0.0
    %730 = vmatmul.mubr.f32.gmra.mxu0 %v639
    %v731 = vpop.f32.mrf.mxu0
    %v732 = vadd.f32 %v648, %v731
    %v733 = vpop.f32.mrf.mxu0
    %v734 = vadd.f32 %v652, %v733
    %735 = vdwg.mxu0
    %736 = vmatprep.subr.mxu0 %v451
    %737 = vmatpush1.msra.mxu0 %v450
    %738 = vmatprep.subr.mxu0 %v447
    %739 = vmatpush1.msra.mxu0 %v446
    %740 = vmatprep.subr.mxu0 %v443
    %741 = vmatpush1.msra.mxu0 %v442
    %742 = vmatprep.subr.mxu0 %v439
    %743 = vmatpush1.msra.mxu0 %v438
    %744 = vmatprep.subr.mxu0 %v435
    %745 = vmatpush1.msra.mxu0 %v434
    %746 = vmatprep.subr.mxu0 %v431
    %747 = vmatpush1.msra.mxu0 %v430
    %748 = vmatprep.subr.mxu0 %v427
    %749 = vmatpush1.msra.mxu0 %v426
    %750 = vmatprep.subr.mxu0 %v423
    %751 = vmatpush1.msra.mxu0 %v422
    %752 = vmatprep.subr.mxu0 %v419
    %753 = vmatpush1.msra.mxu0 %v418
    %754 = vmatprep.subr.mxu0 %v415
    %755 = vmatpush1.msra.mxu0 %v414
    %756 = vmatprep.subr.mxu0 %v411
    %757 = vmatpush1.msra.mxu0 %v410
    %758 = vmatprep.subr.mxu0 %v407
    %759 = vmatpush1.msra.mxu0 %v406
    %760 = vmatprep.subr.mxu0 %v403
    %761 = vmatpush1.msra.mxu0 %v402
    %762 = vmatprep.subr.mxu0 %v399
    %763 = vmatpush1.msra.mxu0 %v398
    %764 = vmatprep.subr.mxu0 %v395
    %765 = vmatpush1.msra.mxu0 %v394
    %766 = vmatprep.subr.mxu0 %v391
    %767 = vmatpush1.msra.mxu0 %v390
    %768 = vmatprep.subr.mxu0 0.0
    %769 = vmatpush2.msra.mxu0 0.0
    %770 = vmatprep.subr.mxu0 0.0
    %771 = vmatpush2.msra.mxu0 0.0
    %772 = vmatprep.subr.mxu0 0.0
    %773 = vmatpush2.msra.mxu0 0.0
    %774 = vmatprep.subr.mxu0 0.0
    %775 = vmatpush2.msra.mxu0 0.0
    %776 = vmatprep.subr.mxu0 0.0
    %777 = vmatpush2.msra.mxu0 0.0
    %778 = vmatprep.subr.mxu0 0.0
    %779 = vmatpush2.msra.mxu0 0.0
    %780 = vmatprep.subr.mxu0 0.0
    %781 = vmatpush2.msra.mxu0 0.0
    %782 = vmatprep.subr.mxu0 0.0
    %783 = vmatpush2.msra.mxu0 0.0
    %784 = vmatprep.subr.mxu0 0.0
    %785 = vmatpush2.msra.mxu0 0.0
    %786 = vmatprep.subr.mxu0 0.0
    %787 = vmatpush2.msra.mxu0 0.0
    %788 = vmatprep.subr.mxu0 0.0
    %789 = vmatpush2.msra.mxu0 0.0
    %790 = vmatprep.subr.mxu0 0.0
    %791 = vmatpush2.msra.mxu0 0.0
    %792 = vmatprep.subr.mxu0 0.0
    %793 = vmatpush2.msra.mxu0 0.0
    %794 = vmatprep.subr.mxu0 0.0
    %795 = vmatpush2.msra.mxu0 0.0
    %796 = vmatprep.subr.mxu0 0.0
    %797 = vmatpush2.msra.mxu0 0.0
    %798 = vmatprep.subr.mxu0 0.0
    %799 = vmatpush2.msra.mxu0 0.0
    %800 = vmatprep.mubr.f32.mxu0 0.0
    %801 = vmatmul.mubr.f32.gmra.mxu0 %v639
    %v802 = vpop.f32.mrf.mxu0
    %v803 = vadd.f32 %v656, %v802
    %v804 = vpop.f32.mrf.mxu0
    %v805 = vadd.f32 %v660, %v804
    %806 = vdwg.mxu0
    %v807 = vxor.u32 %v732, 2147483648
    %v808 = vmul.f32 %v807, 1.442695
    %v809 = vpow.pop %v808
    %v810 = vadd.f32 %v809, 1.0
    %v811 = vrcp.pop %v810
    %v812 = vmul.f32 1.0, %v811
    %v813 = vxor.u32 %v734, 2147483648
    %v814 = vmul.f32 %v813, 1.442695
    %v815 = vpow.pop %v814
    %v816 = vadd.f32 %v815, 1.0
    %v817 = vrcp.pop %v816
    %v818 = vmul.f32 1.0, %v817
    %v819 = vtanh.pop %v803
    %v820 = vxor.u32 %v805, 2147483648
    %v821 = vmul.f32 %v820, 1.442695
    %v822 = vpow.pop %v821
    %v823 = vadd.f32 %v822, 1.0
    %v824 = vrcp.pop %v823
    %v825 = vmul.f32 1.0, %v824
    %v826 = vmul.f32 %v818, %v637
    %v827 = vmul.f32 %v812, %v819
    %v828 = vadd.f32 %v826, %v827
    %v829 = vtanh.pop %v828
    %v830 = vmul.f32 %v825, %v829
    %831 = vst [vmem:[#allocation3 + $0x1] sm:$0x1] %v830
    %832 = vst [vmem:[#allocation4 + $0x6] sm:$0x1] %v830
    %s833 = scalar_lea.vmem [#allocation2], 2
    %v834 = vld [vmem:[%s833] ss:$8 sm:$0xf]
    %v836 = vlaneseq
    %v837 = vshrl.u32 %v836, 7
    %v838 = vsub.s32 0, %v837
    %v839 = vrot.slane %v834, %v838
    %v840 = vlaneseq
    %v841 = vshrl.u32 %v840, 7
    %v842 = vsub.s32 1, %v841
    %v843 = vrot.slane %v834, %v842
    %v844 = vlaneseq
    %v845 = vshrl.u32 %v844, 7
    %v846 = vsub.s32 2, %v845
    %v847 = vrot.slane %v834, %v846
    %v848 = vlaneseq
    %v849 = vshrl.u32 %v848, 7
    %v850 = vsub.s32 3, %v849
    %v851 = vrot.slane %v834, %v850
    %856 = vmatprep.subr.mxu0 %v449
    %857 = vmatpush1.msra.mxu0 %v448
    %858 = vmatprep.subr.mxu0 %v445
    %859 = vmatpush1.msra.mxu0 %v444
    %860 = vmatprep.subr.mxu0 %v441
    %861 = vmatpush1.msra.mxu0 %v440
    %862 = vmatprep.subr.mxu0 %v437
    %863 = vmatpush1.msra.mxu0 %v436
    %864 = vmatprep.subr.mxu0 %v433
    %865 = vmatpush1.msra.mxu0 %v432
    %866 = vmatprep.subr.mxu0 %v429
    %867 = vmatpush1.msra.mxu0 %v428
    %868 = vmatprep.subr.mxu0 %v425
    %869 = vmatpush1.msra.mxu0 %v424
    %870 = vmatprep.subr.mxu0 %v421
    %871 = vmatpush1.msra.mxu0 %v420
    %872 = vmatprep.subr.mxu0 %v417
    %873 = vmatpush1.msra.mxu0 %v416
    %874 = vmatprep.subr.mxu0 %v413
    %875 = vmatpush1.msra.mxu0 %v412
    %876 = vmatprep.subr.mxu0 %v409
    %877 = vmatpush1.msra.mxu0 %v408
    %878 = vmatprep.subr.mxu0 %v405
    %879 = vmatpush1.msra.mxu0 %v404
    %880 = vmatprep.subr.mxu0 %v401
    %881 = vmatpush1.msra.mxu0 %v400
    %882 = vmatprep.subr.mxu0 %v397
    %883 = vmatpush1.msra.mxu0 %v396
    %884 = vmatprep.subr.mxu0 %v393
    %885 = vmatpush1.msra.mxu0 %v392
    %886 = vmatprep.subr.mxu0 %v389
    %887 = vmatpush1.msra.mxu0 %v388
    %888 = vmatprep.subr.mxu0 0.0
    %889 = vmatpush2.msra.mxu0 0.0
    %890 = vmatprep.subr.mxu0 0.0
    %891 = vmatpush2.msra.mxu0 0.0
    %892 = vmatprep.subr.mxu0 0.0
    %893 = vmatpush2.msra.mxu0 0.0
    %894 = vmatprep.subr.mxu0 0.0
    %895 = vmatpush2.msra.mxu0 0.0
    %896 = vmatprep.subr.mxu0 0.0
    %897 = vmatpush2.msra.mxu0 0.0
    %898 = vmatprep.subr.mxu0 0.0
    %899 = vmatpush2.msra.mxu0 0.0
    %900 = vmatprep.subr.mxu0 0.0
    %901 = vmatpush2.msra.mxu0 0.0
    %902 = vmatprep.subr.mxu0 0.0
    %903 = vmatpush2.msra.mxu0 0.0
    %904 = vmatprep.subr.mxu0 0.0
    %905 = vmatpush2.msra.mxu0 0.0
    %906 = vmatprep.subr.mxu0 0.0
    %907 = vmatpush2.msra.mxu0 0.0
    %908 = vmatprep.subr.mxu0 0.0
    %909 = vmatpush2.msra.mxu0 0.0
    %910 = vmatprep.subr.mxu0 0.0
    %911 = vmatpush2.msra.mxu0 0.0
    %912 = vmatprep.subr.mxu0 0.0
    %913 = vmatpush2.msra.mxu0 0.0
    %914 = vmatprep.subr.mxu0 0.0
    %915 = vmatpush2.msra.mxu0 0.0
    %916 = vmatprep.subr.mxu0 0.0
    %917 = vmatpush2.msra.mxu0 0.0
    %918 = vmatprep.subr.mxu0 0.0
    %919 = vmatpush2.msra.mxu0 0.0
    %920 = vmatprep.mubr.f32.mxu0 0.0
    %921 = vmatmul.mubr.f32.gmra.mxu0 %v830
    %v922 = vpop.f32.mrf.mxu0
    %v923 = vadd.f32 %v839, %v922
    %v924 = vpop.f32.mrf.mxu0
    %v925 = vadd.f32 %v843, %v924
    %926 = vdwg.mxu0
    %927 = vmatprep.subr.mxu0 %v451
    %928 = vmatpush1.msra.mxu0 %v450
    %929 = vmatprep.subr.mxu0 %v447
    %930 = vmatpush1.msra.mxu0 %v446
    %931 = vmatprep.subr.mxu0 %v443
    %932 = vmatpush1.msra.mxu0 %v442
    %933 = vmatprep.subr.mxu0 %v439
    %934 = vmatpush1.msra.mxu0 %v438
    %935 = vmatprep.subr.mxu0 %v435
    %936 = vmatpush1.msra.mxu0 %v434
    %937 = vmatprep.subr.mxu0 %v431
    %938 = vmatpush1.msra.mxu0 %v430
    %939 = vmatprep.subr.mxu0 %v427
    %940 = vmatpush1.msra.mxu0 %v426
    %941 = vmatprep.subr.mxu0 %v423
    %942 = vmatpush1.msra.mxu0 %v422
    %943 = vmatprep.subr.mxu0 %v419
    %944 = vmatpush1.msra.mxu0 %v418
    %945 = vmatprep.subr.mxu0 %v415
    %946 = vmatpush1.msra.mxu0 %v414
    %947 = vmatprep.subr.mxu0 %v411
    %948 = vmatpush1.msra.mxu0 %v410
    %949 = vmatprep.subr.mxu0 %v407
    %950 = vmatpush1.msra.mxu0 %v406
    %951 = vmatprep.subr.mxu0 %v403
    %952 = vmatpush1.msra.mxu0 %v402
    %953 = vmatprep.subr.mxu0 %v399
    %954 = vmatpush1.msra.mxu0 %v398
    %955 = vmatprep.subr.mxu0 %v395
    %956 = vmatpush1.msra.mxu0 %v394
    %957 = vmatprep.subr.mxu0 %v391
    %958 = vmatpush1.msra.mxu0 %v390
    %959 = vmatprep.subr.mxu0 0.0
    %960 = vmatpush2.msra.mxu0 0.0
    %961 = vmatprep.subr.mxu0 0.0
    %962 = vmatpush2.msra.mxu0 0.0
    %963 = vmatprep.subr.mxu0 0.0
    %964 = vmatpush2.msra.mxu0 0.0
    %965 = vmatprep.subr.mxu0 0.0
    %966 = vmatpush2.msra.mxu0 0.0
    %967 = vmatprep.subr.mxu0 0.0
    %968 = vmatpush2.msra.mxu0 0.0
    %969 = vmatprep.subr.mxu0 0.0
    %970 = vmatpush2.msra.mxu0 0.0
    %971 = vmatprep.subr.mxu0 0.0
    %972 = vmatpush2.msra.mxu0 0.0
    %973 = vmatprep.subr.mxu0 0.0
    %974 = vmatpush2.msra.mxu0 0.0
    %975 = vmatprep.subr.mxu0 0.0
    %976 = vmatpush2.msra.mxu0 0.0
    %977 = vmatprep.subr.mxu0 0.0
    %978 = vmatpush2.msra.mxu0 0.0
    %979 = vmatprep.subr.mxu0 0.0
    %980 = vmatpush2.msra.mxu0 0.0
    %981 = vmatprep.subr.mxu0 0.0
    %982 = vmatpush2.msra.mxu0 0.0
    %983 = vmatprep.subr.mxu0 0.0
    %984 = vmatpush2.msra.mxu0 0.0
    %985 = vmatprep.subr.mxu0 0.0
    %986 = vmatpush2.msra.mxu0 0.0
    %987 = vmatprep.subr.mxu0 0.0
    %988 = vmatpush2.msra.mxu0 0.0
    %989 = vmatprep.subr.mxu0 0.0
    %990 = vmatpush2.msra.mxu0 0.0
    %991 = vmatprep.mubr.f32.mxu0 0.0
    %992 = vmatmul.mubr.f32.gmra.mxu0 %v830
    %v993 = vpop.f32.mrf.mxu0
    %v994 = vadd.f32 %v847, %v993
    %v995 = vpop.f32.mrf.mxu0
    %v996 = vadd.f32 %v851, %v995
    %997 = vdwg.mxu0
    %v998 = vxor.u32 %v923, 2147483648
    %v999 = vmul.f32 %v998, 1.442695
    %v1000 = vpow.pop %v999
    %v1001 = vadd.f32 %v1000, 1.0
    %v1002 = vrcp.pop %v1001
    %v1003 = vmul.f32 1.0, %v1002
    %v1004 = vxor.u32 %v925, 2147483648
    %v1005 = vmul.f32 %v1004, 1.442695
    %v1006 = vpow.pop %v1005
    %v1007 = vadd.f32 %v1006, 1.0
    %v1008 = vrcp.pop %v1007
    %v1009 = vmul.f32 1.0, %v1008
    %v1010 = vtanh.pop %v994
    %v1011 = vxor.u32 %v996, 2147483648
    %v1012 = vmul.f32 %v1011, 1.442695
    %v1013 = vpow.pop %v1012
    %v1014 = vadd.f32 %v1013, 1.0
    %v1015 = vrcp.pop %v1014
    %v1016 = vmul.f32 1.0, %v1015
    %v1017 = vmul.f32 %v1009, %v828
    %v1018 = vmul.f32 %v1003, %v1010
    %v1019 = vadd.f32 %v1017, %v1018
    %v1020 = vtanh.pop %v1019
    %v1021 = vmul.f32 %v1016, %v1020
    %1022 = vst [vmem:[#allocation3 + $0x2] sm:$0x1] %v1021
    %1023 = vst [vmem:[#allocation4 + $0x5] sm:$0x1] %v1021
    %s1024 = scalar_lea.vmem [#allocation2], 3
    %v1025 = vld [vmem:[%s1024] ss:$8 sm:$0xf]
    %v1027 = vlaneseq
    %v1028 = vshrl.u32 %v1027, 7
    %v1029 = vsub.s32 0, %v1028
    %v1030 = vrot.slane %v1025, %v1029
    %v1031 = vlaneseq
    %v1032 = vshrl.u32 %v1031, 7
    %v1033 = vsub.s32 1, %v1032
    %v1034 = vrot.slane %v1025, %v1033
    %v1035 = vlaneseq
    %v1036 = vshrl.u32 %v1035, 7
    %v1037 = vsub.s32 2, %v1036
    %v1038 = vrot.slane %v1025, %v1037
    %v1039 = vlaneseq
    %v1040 = vshrl.u32 %v1039, 7
    %v1041 = vsub.s32 3, %v1040
    %v1042 = vrot.slane %v1025, %v1041
    %1047 = vmatprep.subr.mxu0 %v449
    %1048 = vmatpush1.msra.mxu0 %v448
    %1049 = vmatprep.subr.mxu0 %v445
    %1050 = vmatpush1.msra.mxu0 %v444
    %1051 = vmatprep.subr.mxu0 %v441
    %1052 = vmatpush1.msra.mxu0 %v440
    %1053 = vmatprep.subr.mxu0 %v437
    %1054 = vmatpush1.msra.mxu0 %v436
    %1055 = vmatprep.subr.mxu0 %v433
    %1056 = vmatpush1.msra.mxu0 %v432
    %1057 = vmatprep.subr.mxu0 %v429
    %1058 = vmatpush1.msra.mxu0 %v428
    %1059 = vmatprep.subr.mxu0 %v425
    %1060 = vmatpush1.msra.mxu0 %v424
    %1061 = vmatprep.subr.mxu0 %v421
    %1062 = vmatpush1.msra.mxu0 %v420
    %1063 = vmatprep.subr.mxu0 %v417
    %1064 = vmatpush1.msra.mxu0 %v416
    %1065 = vmatprep.subr.mxu0 %v413
    %1066 = vmatpush1.msra.mxu0 %v412
    %1067 = vmatprep.subr.mxu0 %v409
    %1068 = vmatpush1.msra.mxu0 %v408
    %1069 = vmatprep.subr.mxu0 %v405
    %1070 = vmatpush1.msra.mxu0 %v404
    %1071 = vmatprep.subr.mxu0 %v401
    %1072 = vmatpush1.msra.mxu0 %v400
    %1073 = vmatprep.subr.mxu0 %v397
    %1074 = vmatpush1.msra.mxu0 %v396
    %1075 = vmatprep.subr.mxu0 %v393
    %1076 = vmatpush1.msra.mxu0 %v392
    %1077 = vmatprep.subr.mxu0 %v389
    %1078 = vmatpush1.msra.mxu0 %v388
    %1079 = vmatprep.subr.mxu0 0.0
    %1080 = vmatpush2.msra.mxu0 0.0
    %1081 = vmatprep.subr.mxu0 0.0
    %1082 = vmatpush2.msra.mxu0 0.0
    %1083 = vmatprep.subr.mxu0 0.0
    %1084 = vmatpush2.msra.mxu0 0.0
    %1085 = vmatprep.subr.mxu0 0.0
    %1086 = vmatpush2.msra.mxu0 0.0
    %1087 = vmatprep.subr.mxu0 0.0
    %1088 = vmatpush2.msra.mxu0 0.0
    %1089 = vmatprep.subr.mxu0 0.0
    %1090 = vmatpush2.msra.mxu0 0.0
    %1091 = vmatprep.subr.mxu0 0.0
    %1092 = vmatpush2.msra.mxu0 0.0
    %1093 = vmatprep.subr.mxu0 0.0
    %1094 = vmatpush2.msra.mxu0 0.0
    %1095 = vmatprep.subr.mxu0 0.0
    %1096 = vmatpush2.msra.mxu0 0.0
    %1097 = vmatprep.subr.mxu0 0.0
    %1098 = vmatpush2.msra.mxu0 0.0
    %1099 = vmatprep.subr.mxu0 0.0
    %1100 = vmatpush2.msra.mxu0 0.0
    %1101 = vmatprep.subr.mxu0 0.0
    %1102 = vmatpush2.msra.mxu0 0.0
    %1103 = vmatprep.subr.mxu0 0.0
    %1104 = vmatpush2.msra.mxu0 0.0
    %1105 = vmatprep.subr.mxu0 0.0
    %1106 = vmatpush2.msra.mxu0 0.0
    %1107 = vmatprep.subr.mxu0 0.0
    %1108 = vmatpush2.msra.mxu0 0.0
    %1109 = vmatprep.subr.mxu0 0.0
    %1110 = vmatpush2.msra.mxu0 0.0
    %1111 = vmatprep.mubr.f32.mxu0 0.0
    %1112 = vmatmul.mubr.f32.gmra.mxu0 %v1021
    %v1113 = vpop.f32.mrf.mxu0
    %v1114 = vadd.f32 %v1030, %v1113
    %v1115 = vpop.f32.mrf.mxu0
    %v1116 = vadd.f32 %v1034, %v1115
    %1117 = vdwg.mxu0
    %1118 = vmatprep.subr.mxu0 %v451
    %1119 = vmatpush1.msra.mxu0 %v450
    %1120 = vmatprep.subr.mxu0 %v447
    %1121 = vmatpush1.msra.mxu0 %v446
    %1122 = vmatprep.subr.mxu0 %v443
    %1123 = vmatpush1.msra.mxu0 %v442
    %1124 = vmatprep.subr.mxu0 %v439
    %1125 = vmatpush1.msra.mxu0 %v438
    %1126 = vmatprep.subr.mxu0 %v435
    %1127 = vmatpush1.msra.mxu0 %v434
    %1128 = vmatprep.subr.mxu0 %v431
    %1129 = vmatpush1.msra.mxu0 %v430
    %1130 = vmatprep.subr.mxu0 %v427
    %1131 = vmatpush1.msra.mxu0 %v426
    %1132 = vmatprep.subr.mxu0 %v423
    %1133 = vmatpush1.msra.mxu0 %v422
    %1134 = vmatprep.subr.mxu0 %v419
    %1135 = vmatpush1.msra.mxu0 %v418
    %1136 = vmatprep.subr.mxu0 %v415
    %1137 = vmatpush1.msra.mxu0 %v414
    %1138 = vmatprep.subr.mxu0 %v411
    %1139 = vmatpush1.msra.mxu0 %v410
    %1140 = vmatprep.subr.mxu0 %v407
    %1141 = vmatpush1.msra.mxu0 %v406
    %1142 = vmatprep.subr.mxu0 %v403
    %1143 = vmatpush1.msra.mxu0 %v402
    %1144 = vmatprep.subr.mxu0 %v399
    %1145 = vmatpush1.msra.mxu0 %v398
    %1146 = vmatprep.subr.mxu0 %v395
    %1147 = vmatpush1.msra.mxu0 %v394
    %1148 = vmatprep.subr.mxu0 %v391
    %1149 = vmatpush1.msra.mxu0 %v390
    %1150 = vmatprep.subr.mxu0 0.0
    %1151 = vmatpush2.msra.mxu0 0.0
    %1152 = vmatprep.subr.mxu0 0.0
    %1153 = vmatpush2.msra.mxu0 0.0
    %1154 = vmatprep.subr.mxu0 0.0
    %1155 = vmatpush2.msra.mxu0 0.0
    %1156 = vmatprep.subr.mxu0 0.0
    %1157 = vmatpush2.msra.mxu0 0.0
    %1158 = vmatprep.subr.mxu0 0.0
    %1159 = vmatpush2.msra.mxu0 0.0
    %1160 = vmatprep.subr.mxu0 0.0
    %1161 = vmatpush2.msra.mxu0 0.0
    %1162 = vmatprep.subr.mxu0 0.0
    %1163 = vmatpush2.msra.mxu0 0.0
    %1164 = vmatprep.subr.mxu0 0.0
    %1165 = vmatpush2.msra.mxu0 0.0
    %1166 = vmatprep.subr.mxu0 0.0
    %1167 = vmatpush2.msra.mxu0 0.0
    %1168 = vmatprep.subr.mxu0 0.0
    %1169 = vmatpush2.msra.mxu0 0.0
    %1170 = vmatprep.subr.mxu0 0.0
    %1171 = vmatpush2.msra.mxu0 0.0
    %1172 = vmatprep.subr.mxu0 0.0
    %1173 = vmatpush2.msra.mxu0 0.0
    %1174 = vmatprep.subr.mxu0 0.0
    %1175 = vmatpush2.msra.mxu0 0.0
    %1176 = vmatprep.subr.mxu0 0.0
    %1177 = vmatpush2.msra.mxu0 0.0
    %1178 = vmatprep.subr.mxu0 0.0
    %1179 = vmatpush2.msra.mxu0 0.0
    %1180 = vmatprep.subr.mxu0 0.0
    %1181 = vmatpush2.msra.mxu0 0.0
    %1182 = vmatprep.mubr.f32.mxu0 0.0
    %1183 = vmatmul.mubr.f32.gmra.mxu0 %v1021
    %v1184 = vpop.f32.mrf.mxu0
    %v1185 = vadd.f32 %v1038, %v1184
    %v1186 = vpop.f32.mrf.mxu0
    %v1187 = vadd.f32 %v1042, %v1186
    %1188 = vdwg.mxu0
    %v1189 = vxor.u32 %v1114, 2147483648
    %v1190 = vmul.f32 %v1189, 1.442695
    %v1191 = vpow.pop %v1190
    %v1192 = vadd.f32 %v1191, 1.0
    %v1193 = vrcp.pop %v1192
    %v1194 = vmul.f32 1.0, %v1193
    %v1195 = vxor.u32 %v1116, 2147483648
    %v1196 = vmul.f32 %v1195, 1.442695
    %v1197 = vpow.pop %v1196
    %v1198 = vadd.f32 %v1197, 1.0
    %v1199 = vrcp.pop %v1198
    %v1200 = vmul.f32 1.0, %v1199
    %v1201 = vtanh.pop %v1185
    %v1202 = vxor.u32 %v1187, 2147483648
    %v1203 = vmul.f32 %v1202, 1.442695
    %v1204 = vpow.pop %v1203
    %v1205 = vadd.f32 %v1204, 1.0
    %v1206 = vrcp.pop %v1205
    %v1207 = vmul.f32 1.0, %v1206
    %v1208 = vmul.f32 %v1200, %v1019
    %v1209 = vmul.f32 %v1194, %v1201
    %v1210 = vadd.f32 %v1208, %v1209
    %v1211 = vtanh.pop %v1210
    %v1212 = vmul.f32 %v1207, %v1211
    %1213 = vst [vmem:[#allocation3 + $0x3] sm:$0x1] %v1212
    %1214 = vst [vmem:[#allocation4 + $0x4] sm:$0x1] %v1212
    %s1215 = scalar_lea.vmem [#allocation2], 4
    %v1216 = vld [vmem:[%s1215] ss:$8 sm:$0xf]
    %v1218 = vlaneseq
    %v1219 = vshrl.u32 %v1218, 7
    %v1220 = vsub.s32 0, %v1219
    %v1221 = vrot.slane %v1216, %v1220
    %v1222 = vlaneseq
    %v1223 = vshrl.u32 %v1222, 7
    %v1224 = vsub.s32 1, %v1223
    %v1225 = vrot.slane %v1216, %v1224
    %v1226 = vlaneseq
    %v1227 = vshrl.u32 %v1226, 7
    %v1228 = vsub.s32 2, %v1227
    %v1229 = vrot.slane %v1216, %v1228
    %v1230 = vlaneseq
    %v1231 = vshrl.u32 %v1230, 7
    %v1232 = vsub.s32 3, %v1231
    %v1233 = vrot.slane %v1216, %v1232
    %1238 = vmatprep.subr.mxu0 %v449
    %1239 = vmatpush1.msra.mxu0 %v448
    %1240 = vmatprep.subr.mxu0 %v445
    %1241 = vmatpush1.msra.mxu0 %v444
    %1242 = vmatprep.subr.mxu0 %v441
    %1243 = vmatpush1.msra.mxu0 %v440
    %1244 = vmatprep.subr.mxu0 %v437
    %1245 = vmatpush1.msra.mxu0 %v436
    %1246 = vmatprep.subr.mxu0 %v433
    %1247 = vmatpush1.msra.mxu0 %v432
    %1248 = vmatprep.subr.mxu0 %v429
    %1249 = vmatpush1.msra.mxu0 %v428
    %1250 = vmatprep.subr.mxu0 %v425
    %1251 = vmatpush1.msra.mxu0 %v424
    %1252 = vmatprep.subr.mxu0 %v421
    %1253 = vmatpush1.msra.mxu0 %v420
    %1254 = vmatprep.subr.mxu0 %v417
    %1255 = vmatpush1.msra.mxu0 %v416
    %1256 = vmatprep.subr.mxu0 %v413
    %1257 = vmatpush1.msra.mxu0 %v412
    %1258 = vmatprep.subr.mxu0 %v409
    %1259 = vmatpush1.msra.mxu0 %v408
    %1260 = vmatprep.subr.mxu0 %v405
    %1261 = vmatpush1.msra.mxu0 %v404
    %1262 = vmatprep.subr.mxu0 %v401
    %1263 = vmatpush1.msra.mxu0 %v400
    %1264 = vmatprep.subr.mxu0 %v397
    %1265 = vmatpush1.msra.mxu0 %v396
    %1266 = vmatprep.subr.mxu0 %v393
    %1267 = vmatpush1.msra.mxu0 %v392
    %1268 = vmatprep.subr.mxu0 %v389
    %1269 = vmatpush1.msra.mxu0 %v388
    %1270 = vmatprep.subr.mxu0 0.0
    %1271 = vmatpush2.msra.mxu0 0.0
    %1272 = vmatprep.subr.mxu0 0.0
    %1273 = vmatpush2.msra.mxu0 0.0
    %1274 = vmatprep.subr.mxu0 0.0
    %1275 = vmatpush2.msra.mxu0 0.0
    %1276 = vmatprep.subr.mxu0 0.0
    %1277 = vmatpush2.msra.mxu0 0.0
    %1278 = vmatprep.subr.mxu0 0.0
    %1279 = vmatpush2.msra.mxu0 0.0
    %1280 = vmatprep.subr.mxu0 0.0
    %1281 = vmatpush2.msra.mxu0 0.0
    %1282 = vmatprep.subr.mxu0 0.0
    %1283 = vmatpush2.msra.mxu0 0.0
    %1284 = vmatprep.subr.mxu0 0.0
    %1285 = vmatpush2.msra.mxu0 0.0
    %1286 = vmatprep.subr.mxu0 0.0
    %1287 = vmatpush2.msra.mxu0 0.0
    %1288 = vmatprep.subr.mxu0 0.0
    %1289 = vmatpush2.msra.mxu0 0.0
    %1290 = vmatprep.subr.mxu0 0.0
    %1291 = vmatpush2.msra.mxu0 0.0
    %1292 = vmatprep.subr.mxu0 0.0
    %1293 = vmatpush2.msra.mxu0 0.0
    %1294 = vmatprep.subr.mxu0 0.0
    %1295 = vmatpush2.msra.mxu0 0.0
    %1296 = vmatprep.subr.mxu0 0.0
    %1297 = vmatpush2.msra.mxu0 0.0
    %1298 = vmatprep.subr.mxu0 0.0
    %1299 = vmatpush2.msra.mxu0 0.0
    %1300 = vmatprep.subr.mxu0 0.0
    %1301 = vmatpush2.msra.mxu0 0.0
    %1302 = vmatprep.mubr.f32.mxu0 0.0
    %1303 = vmatmul.mubr.f32.gmra.mxu0 %v1212
    %v1304 = vpop.f32.mrf.mxu0
    %v1305 = vadd.f32 %v1221, %v1304
    %v1306 = vpop.f32.mrf.mxu0
    %v1307 = vadd.f32 %v1225, %v1306
    %1308 = vdwg.mxu0
    %1309 = vmatprep.subr.mxu0 %v451
    %1310 = vmatpush1.msra.mxu0 %v450
    %1311 = vmatprep.subr.mxu0 %v447
    %1312 = vmatpush1.msra.mxu0 %v446
    %1313 = vmatprep.subr.mxu0 %v443
    %1314 = vmatpush1.msra.mxu0 %v442
    %1315 = vmatprep.subr.mxu0 %v439
    %1316 = vmatpush1.msra.mxu0 %v438
    %1317 = vmatprep.subr.mxu0 %v435
    %1318 = vmatpush1.msra.mxu0 %v434
    %1319 = vmatprep.subr.mxu0 %v431
    %1320 = vmatpush1.msra.mxu0 %v430
    %1321 = vmatprep.subr.mxu0 %v427
    %1322 = vmatpush1.msra.mxu0 %v426
    %1323 = vmatprep.subr.mxu0 %v423
    %1324 = vmatpush1.msra.mxu0 %v422
    %1325 = vmatprep.subr.mxu0 %v419
    %1326 = vmatpush1.msra.mxu0 %v418
    %1327 = vmatprep.subr.mxu0 %v415
    %1328 = vmatpush1.msra.mxu0 %v414
    %1329 = vmatprep.subr.mxu0 %v411
    %1330 = vmatpush1.msra.mxu0 %v410
    %1331 = vmatprep.subr.mxu0 %v407
    %1332 = vmatpush1.msra.mxu0 %v406
    %1333 = vmatprep.subr.mxu0 %v403
    %1334 = vmatpush1.msra.mxu0 %v402
    %1335 = vmatprep.subr.mxu0 %v399
    %1336 = vmatpush1.msra.mxu0 %v398
    %1337 = vmatprep.subr.mxu0 %v395
    %1338 = vmatpush1.msra.mxu0 %v394
    %1339 = vmatprep.subr.mxu0 %v391
    %1340 = vmatpush1.msra.mxu0 %v390
    %1341 = vmatprep.subr.mxu0 0.0
    %1342 = vmatpush2.msra.mxu0 0.0
    %1343 = vmatprep.subr.mxu0 0.0
    %1344 = vmatpush2.msra.mxu0 0.0
    %1345 = vmatprep.subr.mxu0 0.0
    %1346 = vmatpush2.msra.mxu0 0.0
    %1347 = vmatprep.subr.mxu0 0.0
    %1348 = vmatpush2.msra.mxu0 0.0
    %1349 = vmatprep.subr.mxu0 0.0
    %1350 = vmatpush2.msra.mxu0 0.0
    %1351 = vmatprep.subr.mxu0 0.0
    %1352 = vmatpush2.msra.mxu0 0.0
    %1353 = vmatprep.subr.mxu0 0.0
    %1354 = vmatpush2.msra.mxu0 0.0
    %1355 = vmatprep.subr.mxu0 0.0
    %1356 = vmatpush2.msra.mxu0 0.0
    %1357 = vmatprep.subr.mxu0 0.0
    %1358 = vmatpush2.msra.mxu0 0.0
    %1359 = vmatprep.subr.mxu0 0.0
    %1360 = vmatpush2.msra.mxu0 0.0
    %1361 = vmatprep.subr.mxu0 0.0
    %1362 = vmatpush2.msra.mxu0 0.0
    %1363 = vmatprep.subr.mxu0 0.0
    %1364 = vmatpush2.msra.mxu0 0.0
    %1365 = vmatprep.subr.mxu0 0.0
    %1366 = vmatpush2.msra.mxu0 0.0
    %1367 = vmatprep.subr.mxu0 0.0
    %1368 = vmatpush2.msra.mxu0 0.0
    %1369 = vmatprep.subr.mxu0 0.0
    %1370 = vmatpush2.msra.mxu0 0.0
    %1371 = vmatprep.subr.mxu0 0.0
    %1372 = vmatpush2.msra.mxu0 0.0
    %1373 = vmatprep.mubr.f32.mxu0 0.0
    %1374 = vmatmul.mubr.f32.gmra.mxu0 %v1212
    %v1375 = vpop.f32.mrf.mxu0
    %v1376 = vadd.f32 %v1229, %v1375
    %v1377 = vpop.f32.mrf.mxu0
    %v1378 = vadd.f32 %v1233, %v1377
    %1379 = vdwg.mxu0
    %v1380 = vxor.u32 %v1305, 2147483648
    %v1381 = vmul.f32 %v1380, 1.442695
    %v1382 = vpow.pop %v1381
    %v1383 = vadd.f32 %v1382, 1.0
    %v1384 = vrcp.pop %v1383
    %v1385 = vmul.f32 1.0, %v1384
    %v1386 = vxor.u32 %v1307, 2147483648
    %v1387 = vmul.f32 %v1386, 1.442695
    %v1388 = vpow.pop %v1387
    %v1389 = vadd.f32 %v1388, 1.0
    %v1390 = vrcp.pop %v1389
    %v1391 = vmul.f32 1.0, %v1390
    %v1392 = vtanh.pop %v1376
    %v1393 = vxor.u32 %v1378, 2147483648
    %v1394 = vmul.f32 %v1393, 1.442695
    %v1395 = vpow.pop %v1394
    %v1396 = vadd.f32 %v1395, 1.0
    %v1397 = vrcp.pop %v1396
    %v1398 = vmul.f32 1.0, %v1397
    %v1399 = vmul.f32 %v1391, %v1210
    %v1400 = vmul.f32 %v1385, %v1392
    %v1401 = vadd.f32 %v1399, %v1400
    %v1402 = vtanh.pop %v1401
    %v1403 = vmul.f32 %v1398, %v1402
    %1404 = vst [vmem:[#allocation3 + $0x4] sm:$0x1] %v1403
    %1405 = vst [vmem:[#allocation4 + $0x3] sm:$0x1] %v1403
    %s1406 = scalar_lea.vmem [#allocation2], 5
    %v1407 = vld [vmem:[%s1406] ss:$8 sm:$0xf]
    %v1409 = vlaneseq
    %v1410 = vshrl.u32 %v1409, 7
    %v1411 = vsub.s32 0, %v1410
    %v1412 = vrot.slane %v1407, %v1411
    %v1413 = vlaneseq
    %v1414 = vshrl.u32 %v1413, 7
    %v1415 = vsub.s32 1, %v1414
    %v1416 = vrot.slane %v1407, %v1415
    %v1417 = vlaneseq
    %v1418 = vshrl.u32 %v1417, 7
    %v1419 = vsub.s32 2, %v1418
    %v1420 = vrot.slane %v1407, %v1419
    %v1421 = vlaneseq
    %v1422 = vshrl.u32 %v1421, 7
    %v1423 = vsub.s32 3, %v1422
    %v1424 = vrot.slane %v1407, %v1423
    %1429 = vmatprep.subr.mxu0 %v449
    %1430 = vmatpush1.msra.mxu0 %v448
    %1431 = vmatprep.subr.mxu0 %v445
    %1432 = vmatpush1.msra.mxu0 %v444
    %1433 = vmatprep.subr.mxu0 %v441
    %1434 = vmatpush1.msra.mxu0 %v440
    %1435 = vmatprep.subr.mxu0 %v437
    %1436 = vmatpush1.msra.mxu0 %v436
    %1437 = vmatprep.subr.mxu0 %v433
    %1438 = vmatpush1.msra.mxu0 %v432
    %1439 = vmatprep.subr.mxu0 %v429
    %1440 = vmatpush1.msra.mxu0 %v428
    %1441 = vmatprep.subr.mxu0 %v425
    %1442 = vmatpush1.msra.mxu0 %v424
    %1443 = vmatprep.subr.mxu0 %v421
    %1444 = vmatpush1.msra.mxu0 %v420
    %1445 = vmatprep.subr.mxu0 %v417
    %1446 = vmatpush1.msra.mxu0 %v416
    %1447 = vmatprep.subr.mxu0 %v413
    %1448 = vmatpush1.msra.mxu0 %v412
    %1449 = vmatprep.subr.mxu0 %v409
    %1450 = vmatpush1.msra.mxu0 %v408
    %1451 = vmatprep.subr.mxu0 %v405
    %1452 = vmatpush1.msra.mxu0 %v404
    %1453 = vmatprep.subr.mxu0 %v401
    %1454 = vmatpush1.msra.mxu0 %v400
    %1455 = vmatprep.subr.mxu0 %v397
    %1456 = vmatpush1.msra.mxu0 %v396
    %1457 = vmatprep.subr.mxu0 %v393
    %1458 = vmatpush1.msra.mxu0 %v392
    %1459 = vmatprep.subr.mxu0 %v389
    %1460 = vmatpush1.msra.mxu0 %v388
    %1461 = vmatprep.subr.mxu0 0.0
    %1462 = vmatpush2.msra.mxu0 0.0
    %1463 = vmatprep.subr.mxu0 0.0
    %1464 = vmatpush2.msra.mxu0 0.0
    %1465 = vmatprep.subr.mxu0 0.0
    %1466 = vmatpush2.msra.mxu0 0.0
    %1467 = vmatprep.subr.mxu0 0.0
    %1468 = vmatpush2.msra.mxu0 0.0
    %1469 = vmatprep.subr.mxu0 0.0
    %1470 = vmatpush2.msra.mxu0 0.0
    %1471 = vmatprep.subr.mxu0 0.0
    %1472 = vmatpush2.msra.mxu0 0.0
    %1473 = vmatprep.subr.mxu0 0.0
    %1474 = vmatpush2.msra.mxu0 0.0
    %1475 = vmatprep.subr.mxu0 0.0
    %1476 = vmatpush2.msra.mxu0 0.0
    %1477 = vmatprep.subr.mxu0 0.0
    %1478 = vmatpush2.msra.mxu0 0.0
    %1479 = vmatprep.subr.mxu0 0.0
    %1480 = vmatpush2.msra.mxu0 0.0
    %1481 = vmatprep.subr.mxu0 0.0
    %1482 = vmatpush2.msra.mxu0 0.0
    %1483 = vmatprep.subr.mxu0 0.0
    %1484 = vmatpush2.msra.mxu0 0.0
    %1485 = vmatprep.subr.mxu0 0.0
    %1486 = vmatpush2.msra.mxu0 0.0
    %1487 = vmatprep.subr.mxu0 0.0
    %1488 = vmatpush2.msra.mxu0 0.0
    %1489 = vmatprep.subr.mxu0 0.0
    %1490 = vmatpush2.msra.mxu0 0.0
    %1491 = vmatprep.subr.mxu0 0.0
    %1492 = vmatpush2.msra.mxu0 0.0
    %1493 = vmatprep.mubr.f32.mxu0 0.0
    %1494 = vmatmul.mubr.f32.gmra.mxu0 %v1403
    %v1495 = vpop.f32.mrf.mxu0
    %v1496 = vadd.f32 %v1412, %v1495
    %v1497 = vpop.f32.mrf.mxu0
    %v1498 = vadd.f32 %v1416, %v1497
    %1499 = vdwg.mxu0
    %1500 = vmatprep.subr.mxu0 %v451
    %1501 = vmatpush1.msra.mxu0 %v450
    %1502 = vmatprep.subr.mxu0 %v447
    %1503 = vmatpush1.msra.mxu0 %v446
    %1504 = vmatprep.subr.mxu0 %v443
    %1505 = vmatpush1.msra.mxu0 %v442
    %1506 = vmatprep.subr.mxu0 %v439
    %1507 = vmatpush1.msra.mxu0 %v438
    %1508 = vmatprep.subr.mxu0 %v435
    %1509 = vmatpush1.msra.mxu0 %v434
    %1510 = vmatprep.subr.mxu0 %v431
    %1511 = vmatpush1.msra.mxu0 %v430
    %1512 = vmatprep.subr.mxu0 %v427
    %1513 = vmatpush1.msra.mxu0 %v426
    %1514 = vmatprep.subr.mxu0 %v423
    %1515 = vmatpush1.msra.mxu0 %v422
    %1516 = vmatprep.subr.mxu0 %v419
    %1517 = vmatpush1.msra.mxu0 %v418
    %1518 = vmatprep.subr.mxu0 %v415
    %1519 = vmatpush1.msra.mxu0 %v414
    %1520 = vmatprep.subr.mxu0 %v411
    %1521 = vmatpush1.msra.mxu0 %v410
    %1522 = vmatprep.subr.mxu0 %v407
    %1523 = vmatpush1.msra.mxu0 %v406
    %1524 = vmatprep.subr.mxu0 %v403
    %1525 = vmatpush1.msra.mxu0 %v402
    %1526 = vmatprep.subr.mxu0 %v399
    %1527 = vmatpush1.msra.mxu0 %v398
    %1528 = vmatprep.subr.mxu0 %v395
    %1529 = vmatpush1.msra.mxu0 %v394
    %1530 = vmatprep.subr.mxu0 %v391
    %1531 = vmatpush1.msra.mxu0 %v390
    %1532 = vmatprep.subr.mxu0 0.0
    %1533 = vmatpush2.msra.mxu0 0.0
    %1534 = vmatprep.subr.mxu0 0.0
    %1535 = vmatpush2.msra.mxu0 0.0
    %1536 = vmatprep.subr.mxu0 0.0
    %1537 = vmatpush2.msra.mxu0 0.0
    %1538 = vmatprep.subr.mxu0 0.0
    %1539 = vmatpush2.msra.mxu0 0.0
    %1540 = vmatprep.subr.mxu0 0.0
    %1541 = vmatpush2.msra.mxu0 0.0
    %1542 = vmatprep.subr.mxu0 0.0
    %1543 = vmatpush2.msra.mxu0 0.0
    %1544 = vmatprep.subr.mxu0 0.0
    %1545 = vmatpush2.msra.mxu0 0.0
    %1546 = vmatprep.subr.mxu0 0.0
    %1547 = vmatpush2.msra.mxu0 0.0
    %1548 = vmatprep.subr.mxu0 0.0
    %1549 = vmatpush2.msra.mxu0 0.0
    %1550 = vmatprep.subr.mxu0 0.0
    %1551 = vmatpush2.msra.mxu0 0.0
    %1552 = vmatprep.subr.mxu0 0.0
    %1553 = vmatpush2.msra.mxu0 0.0
    %1554 = vmatprep.subr.mxu0 0.0
    %1555 = vmatpush2.msra.mxu0 0.0
    %1556 = vmatprep.subr.mxu0 0.0
    %1557 = vmatpush2.msra.mxu0 0.0
    %1558 = vmatprep.subr.mxu0 0.0
    %1559 = vmatpush2.msra.mxu0 0.0
    %1560 = vmatprep.subr.mxu0 0.0
    %1561 = vmatpush2.msra.mxu0 0.0
    %1562 = vmatprep.subr.mxu0 0.0
    %1563 = vmatpush2.msra.mxu0 0.0
    %1564 = vmatprep.mubr.f32.mxu0 0.0
    %1565 = vmatmul.mubr.f32.gmra.mxu0 %v1403
    %v1566 = vpop.f32.mrf.mxu0
    %v1567 = vadd.f32 %v1420, %v1566
    %v1568 = vpop.f32.mrf.mxu0
    %v1569 = vadd.f32 %v1424, %v1568
    %1570 = vdwg.mxu0
    %v1571 = vxor.u32 %v1496, 2147483648
    %v1572 = vmul.f32 %v1571, 1.442695
    %v1573 = vpow.pop %v1572
    %v1574 = vadd.f32 %v1573, 1.0
    %v1575 = vrcp.pop %v1574
    %v1576 = vmul.f32 1.0, %v1575
    %v1577 = vxor.u32 %v1498, 2147483648
    %v1578 = vmul.f32 %v1577, 1.442695
    %v1579 = vpow.pop %v1578
    %v1580 = vadd.f32 %v1579, 1.0
    %v1581 = vrcp.pop %v1580
    %v1582 = vmul.f32 1.0, %v1581
    %v1583 = vtanh.pop %v1567
    %v1584 = vxor.u32 %v1569, 2147483648
    %v1585 = vmul.f32 %v1584, 1.442695
    %v1586 = vpow.pop %v1585
    %v1587 = vadd.f32 %v1586, 1.0
    %v1588 = vrcp.pop %v1587
    %v1589 = vmul.f32 1.0, %v1588
    %v1590 = vmul.f32 %v1582, %v1401
    %v1591 = vmul.f32 %v1576, %v1583
    %v1592 = vadd.f32 %v1590, %v1591
    %v1593 = vtanh.pop %v1592
    %v1594 = vmul.f32 %v1589, %v1593
    %1595 = vst [vmem:[#allocation3 + $0x5] sm:$0x1] %v1594
    %1596 = vst [vmem:[#allocation4 + $0x2] sm:$0x1] %v1594
    %s1597 = scalar_lea.vmem [#allocation2], 6
    %v1598 = vld [vmem:[%s1597] ss:$8 sm:$0xf]
    %v1600 = vlaneseq
    %v1601 = vshrl.u32 %v1600, 7
    %v1602 = vsub.s32 0, %v1601
    %v1603 = vrot.slane %v1598, %v1602
    %v1604 = vlaneseq
    %v1605 = vshrl.u32 %v1604, 7
    %v1606 = vsub.s32 1, %v1605
    %v1607 = vrot.slane %v1598, %v1606
    %v1608 = vlaneseq
    %v1609 = vshrl.u32 %v1608, 7
    %v1610 = vsub.s32 2, %v1609
    %v1611 = vrot.slane %v1598, %v1610
    %v1612 = vlaneseq
    %v1613 = vshrl.u32 %v1612, 7
    %v1614 = vsub.s32 3, %v1613
    %v1615 = vrot.slane %v1598, %v1614
    %1620 = vmatprep.subr.mxu0 %v449
    %1621 = vmatpush1.msra.mxu0 %v448
    %1622 = vmatprep.subr.mxu0 %v445
    %1623 = vmatpush1.msra.mxu0 %v444
    %1624 = vmatprep.subr.mxu0 %v441
    %1625 = vmatpush1.msra.mxu0 %v440
    %1626 = vmatprep.subr.mxu0 %v437
    %1627 = vmatpush1.msra.mxu0 %v436
    %1628 = vmatprep.subr.mxu0 %v433
    %1629 = vmatpush1.msra.mxu0 %v432
    %1630 = vmatprep.subr.mxu0 %v429
    %1631 = vmatpush1.msra.mxu0 %v428
    %1632 = vmatprep.subr.mxu0 %v425
    %1633 = vmatpush1.msra.mxu0 %v424
    %1634 = vmatprep.subr.mxu0 %v421
    %1635 = vmatpush1.msra.mxu0 %v420
    %1636 = vmatprep.subr.mxu0 %v417
    %1637 = vmatpush1.msra.mxu0 %v416
    %1638 = vmatprep.subr.mxu0 %v413
    %1639 = vmatpush1.msra.mxu0 %v412
    %1640 = vmatprep.subr.mxu0 %v409
    %1641 = vmatpush1.msra.mxu0 %v408
    %1642 = vmatprep.subr.mxu0 %v405
    %1643 = vmatpush1.msra.mxu0 %v404
    %1644 = vmatprep.subr.mxu0 %v401
    %1645 = vmatpush1.msra.mxu0 %v400
    %1646 = vmatprep.subr.mxu0 %v397
    %1647 = vmatpush1.msra.mxu0 %v396
    %1648 = vmatprep.subr.mxu0 %v393
    %1649 = vmatpush1.msra.mxu0 %v392
    %1650 = vmatprep.subr.mxu0 %v389
    %1651 = vmatpush1.msra.mxu0 %v388
    %1652 = vmatprep.subr.mxu0 0.0
    %1653 = vmatpush2.msra.mxu0 0.0
    %1654 = vmatprep.subr.mxu0 0.0
    %1655 = vmatpush2.msra.mxu0 0.0
    %1656 = vmatprep.subr.mxu0 0.0
    %1657 = vmatpush2.msra.mxu0 0.0
    %1658 = vmatprep.subr.mxu0 0.0
    %1659 = vmatpush2.msra.mxu0 0.0
    %1660 = vmatprep.subr.mxu0 0.0
    %1661 = vmatpush2.msra.mxu0 0.0
    %1662 = vmatprep.subr.mxu0 0.0
    %1663 = vmatpush2.msra.mxu0 0.0
    %1664 = vmatprep.subr.mxu0 0.0
    %1665 = vmatpush2.msra.mxu0 0.0
    %1666 = vmatprep.subr.mxu0 0.0
    %1667 = vmatpush2.msra.mxu0 0.0
    %1668 = vmatprep.subr.mxu0 0.0
    %1669 = vmatpush2.msra.mxu0 0.0
    %1670 = vmatprep.subr.mxu0 0.0
    %1671 = vmatpush2.msra.mxu0 0.0
    %1672 = vmatprep.subr.mxu0 0.0
    %1673 = vmatpush2.msra.mxu0 0.0
    %1674 = vmatprep.subr.mxu0 0.0
    %1675 = vmatpush2.msra.mxu0 0.0
    %1676 = vmatprep.subr.mxu0 0.0
    %1677 = vmatpush2.msra.mxu0 0.0
    %1678 = vmatprep.subr.mxu0 0.0
    %1679 = vmatpush2.msra.mxu0 0.0
    %1680 = vmatprep.subr.mxu0 0.0
    %1681 = vmatpush2.msra.mxu0 0.0
    %1682 = vmatprep.subr.mxu0 0.0
    %1683 = vmatpush2.msra.mxu0 0.0
    %1684 = vmatprep.mubr.f32.mxu0 0.0
    %1685 = vmatmul.mubr.f32.gmra.mxu0 %v1594
    %v1686 = vpop.f32.mrf.mxu0
    %v1687 = vadd.f32 %v1603, %v1686
    %v1688 = vpop.f32.mrf.mxu0
    %v1689 = vadd.f32 %v1607, %v1688
    %1690 = vdwg.mxu0
    %1691 = vmatprep.subr.mxu0 %v451
    %1692 = vmatpush1.msra.mxu0 %v450
    %1693 = vmatprep.subr.mxu0 %v447
    %1694 = vmatpush1.msra.mxu0 %v446
    %1695 = vmatprep.subr.mxu0 %v443
    %1696 = vmatpush1.msra.mxu0 %v442
    %1697 = vmatprep.subr.mxu0 %v439
    %1698 = vmatpush1.msra.mxu0 %v438
    %1699 = vmatprep.subr.mxu0 %v435
    %1700 = vmatpush1.msra.mxu0 %v434
    %1701 = vmatprep.subr.mxu0 %v431
    %1702 = vmatpush1.msra.mxu0 %v430
    %1703 = vmatprep.subr.mxu0 %v427
    %1704 = vmatpush1.msra.mxu0 %v426
    %1705 = vmatprep.subr.mxu0 %v423
    %1706 = vmatpush1.msra.mxu0 %v422
    %1707 = vmatprep.subr.mxu0 %v419
    %1708 = vmatpush1.msra.mxu0 %v418
    %1709 = vmatprep.subr.mxu0 %v415
    %1710 = vmatpush1.msra.mxu0 %v414
    %1711 = vmatprep.subr.mxu0 %v411
    %1712 = vmatpush1.msra.mxu0 %v410
    %1713 = vmatprep.subr.mxu0 %v407
    %1714 = vmatpush1.msra.mxu0 %v406
    %1715 = vmatprep.subr.mxu0 %v403
    %1716 = vmatpush1.msra.mxu0 %v402
    %1717 = vmatprep.subr.mxu0 %v399
    %1718 = vmatpush1.msra.mxu0 %v398
    %1719 = vmatprep.subr.mxu0 %v395
    %1720 = vmatpush1.msra.mxu0 %v394
    %1721 = vmatprep.subr.mxu0 %v391
    %1722 = vmatpush1.msra.mxu0 %v390
    %1723 = vmatprep.subr.mxu0 0.0
    %1724 = vmatpush2.msra.mxu0 0.0
    %1725 = vmatprep.subr.mxu0 0.0
    %1726 = vmatpush2.msra.mxu0 0.0
    %1727 = vmatprep.subr.mxu0 0.0
    %1728 = vmatpush2.msra.mxu0 0.0
    %1729 = vmatprep.subr.mxu0 0.0
    %1730 = vmatpush2.msra.mxu0 0.0
    %1731 = vmatprep.subr.mxu0 0.0
    %1732 = vmatpush2.msra.mxu0 0.0
    %1733 = vmatprep.subr.mxu0 0.0
    %1734 = vmatpush2.msra.mxu0 0.0
    %1735 = vmatprep.subr.mxu0 0.0
    %1736 = vmatpush2.msra.mxu0 0.0
    %1737 = vmatprep.subr.mxu0 0.0
    %1738 = vmatpush2.msra.mxu0 0.0
    %1739 = vmatprep.subr.mxu0 0.0
    %1740 = vmatpush2.msra.mxu0 0.0
    %1741 = vmatprep.subr.mxu0 0.0
    %1742 = vmatpush2.msra.mxu0 0.0
    %1743 = vmatprep.subr.mxu0 0.0
    %1744 = vmatpush2.msra.mxu0 0.0
    %1745 = vmatprep.subr.mxu0 0.0
    %1746 = vmatpush2.msra.mxu0 0.0
    %1747 = vmatprep.subr.mxu0 0.0
    %1748 = vmatpush2.msra.mxu0 0.0
    %1749 = vmatprep.subr.mxu0 0.0
    %1750 = vmatpush2.msra.mxu0 0.0
    %1751 = vmatprep.subr.mxu0 0.0
    %1752 = vmatpush2.msra.mxu0 0.0
    %1753 = vmatprep.subr.mxu0 0.0
    %1754 = vmatpush2.msra.mxu0 0.0
    %1755 = vmatprep.mubr.f32.mxu0 0.0
    %1756 = vmatmul.mubr.f32.gmra.mxu0 %v1594
    %v1757 = vpop.f32.mrf.mxu0
    %v1758 = vadd.f32 %v1611, %v1757
    %v1759 = vpop.f32.mrf.mxu0
    %v1760 = vadd.f32 %v1615, %v1759
    %1761 = vdwg.mxu0
    %v1762 = vxor.u32 %v1687, 2147483648
    %v1763 = vmul.f32 %v1762, 1.442695
    %v1764 = vpow.pop %v1763
    %v1765 = vadd.f32 %v1764, 1.0
    %v1766 = vrcp.pop %v1765
    %v1767 = vmul.f32 1.0, %v1766
    %v1768 = vxor.u32 %v1689, 2147483648
    %v1769 = vmul.f32 %v1768, 1.442695
    %v1770 = vpow.pop %v1769
    %v1771 = vadd.f32 %v1770, 1.0
    %v1772 = vrcp.pop %v1771
    %v1773 = vmul.f32 1.0, %v1772
    %v1774 = vtanh.pop %v1758
    %v1775 = vxor.u32 %v1760, 2147483648
    %v1776 = vmul.f32 %v1775, 1.442695
    %v1777 = vpow.pop %v1776
    %v1778 = vadd.f32 %v1777, 1.0
    %v1779 = vrcp.pop %v1778
    %v1780 = vmul.f32 1.0, %v1779
    %v1781 = vmul.f32 %v1773, %v1592
    %v1782 = vmul.f32 %v1767, %v1774
    %v1783 = vadd.f32 %v1781, %v1782
    %v1784 = vtanh.pop %v1783
    %v1785 = vmul.f32 %v1780, %v1784
    %1786 = vst [vmem:[#allocation3 + $0x6] sm:$0x1] %v1785
    %1787 = vst [vmem:[#allocation4 + $0x1] sm:$0x1] %v1785
    %s1788 = scalar_lea.vmem [#allocation2], 7
    %v1789 = vld [vmem:[%s1788] ss:$8 sm:$0xf]
    %v1791 = vlaneseq
    %v1792 = vshrl.u32 %v1791, 7
    %v1793 = vsub.s32 0, %v1792
    %v1794 = vrot.slane %v1789, %v1793
    %v1795 = vlaneseq
    %v1796 = vshrl.u32 %v1795, 7
    %v1797 = vsub.s32 1, %v1796
    %v1798 = vrot.slane %v1789, %v1797
    %v1799 = vlaneseq
    %v1800 = vshrl.u32 %v1799, 7
    %v1801 = vsub.s32 2, %v1800
    %v1802 = vrot.slane %v1789, %v1801
    %v1803 = vlaneseq
    %v1804 = vshrl.u32 %v1803, 7
    %v1805 = vsub.s32 3, %v1804
    %v1806 = vrot.slane %v1789, %v1805
    %1811 = vmatprep.subr.mxu0 %v449
    %1812 = vmatpush1.msra.mxu0 %v448
    %1813 = vmatprep.subr.mxu0 %v445
    %1814 = vmatpush1.msra.mxu0 %v444
    %1815 = vmatprep.subr.mxu0 %v441
    %1816 = vmatpush1.msra.mxu0 %v440
    %1817 = vmatprep.subr.mxu0 %v437
    %1818 = vmatpush1.msra.mxu0 %v436
    %1819 = vmatprep.subr.mxu0 %v433
    %1820 = vmatpush1.msra.mxu0 %v432
    %1821 = vmatprep.subr.mxu0 %v429
    %1822 = vmatpush1.msra.mxu0 %v428
    %1823 = vmatprep.subr.mxu0 %v425
    %1824 = vmatpush1.msra.mxu0 %v424
    %1825 = vmatprep.subr.mxu0 %v421
    %1826 = vmatpush1.msra.mxu0 %v420
    %1827 = vmatprep.subr.mxu0 %v417
    %1828 = vmatpush1.msra.mxu0 %v416
    %1829 = vmatprep.subr.mxu0 %v413
    %1830 = vmatpush1.msra.mxu0 %v412
    %1831 = vmatprep.subr.mxu0 %v409
    %1832 = vmatpush1.msra.mxu0 %v408
    %1833 = vmatprep.subr.mxu0 %v405
    %1834 = vmatpush1.msra.mxu0 %v404
    %1835 = vmatprep.subr.mxu0 %v401
    %1836 = vmatpush1.msra.mxu0 %v400
    %1837 = vmatprep.subr.mxu0 %v397
    %1838 = vmatpush1.msra.mxu0 %v396
    %1839 = vmatprep.subr.mxu0 %v393
    %1840 = vmatpush1.msra.mxu0 %v392
    %1841 = vmatprep.subr.mxu0 %v389
    %1842 = vmatpush1.msra.mxu0 %v388
    %1843 = vmatprep.subr.mxu0 0.0
    %1844 = vmatpush2.msra.mxu0 0.0
    %1845 = vmatprep.subr.mxu0 0.0
    %1846 = vmatpush2.msra.mxu0 0.0
    %1847 = vmatprep.subr.mxu0 0.0
    %1848 = vmatpush2.msra.mxu0 0.0
    %1849 = vmatprep.subr.mxu0 0.0
    %1850 = vmatpush2.msra.mxu0 0.0
    %1851 = vmatprep.subr.mxu0 0.0
    %1852 = vmatpush2.msra.mxu0 0.0
    %1853 = vmatprep.subr.mxu0 0.0
    %1854 = vmatpush2.msra.mxu0 0.0
    %1855 = vmatprep.subr.mxu0 0.0
    %1856 = vmatpush2.msra.mxu0 0.0
    %1857 = vmatprep.subr.mxu0 0.0
    %1858 = vmatpush2.msra.mxu0 0.0
    %1859 = vmatprep.subr.mxu0 0.0
    %1860 = vmatpush2.msra.mxu0 0.0
    %1861 = vmatprep.subr.mxu0 0.0
    %1862 = vmatpush2.msra.mxu0 0.0
    %1863 = vmatprep.subr.mxu0 0.0
    %1864 = vmatpush2.msra.mxu0 0.0
    %1865 = vmatprep.subr.mxu0 0.0
    %1866 = vmatpush2.msra.mxu0 0.0
    %1867 = vmatprep.subr.mxu0 0.0
    %1868 = vmatpush2.msra.mxu0 0.0
    %1869 = vmatprep.subr.mxu0 0.0
    %1870 = vmatpush2.msra.mxu0 0.0
    %1871 = vmatprep.subr.mxu0 0.0
    %1872 = vmatpush2.msra.mxu0 0.0
    %1873 = vmatprep.subr.mxu0 0.0
    %1874 = vmatpush2.msra.mxu0 0.0
    %1875 = vmatprep.mubr.f32.mxu0 0.0
    %1876 = vmatmul.mubr.f32.gmra.mxu0 %v1785
    %v1877 = vpop.f32.mrf.mxu0
    %v1878 = vadd.f32 %v1794, %v1877
    %v1879 = vpop.f32.mrf.mxu0
    %v1880 = vadd.f32 %v1798, %v1879
    %1881 = vdwg.mxu0
    %1882 = vmatprep.subr.mxu0 %v451
    %1883 = vmatpush1.msra.mxu0 %v450
    %1884 = vmatprep.subr.mxu0 %v447
    %1885 = vmatpush1.msra.mxu0 %v446
    %1886 = vmatprep.subr.mxu0 %v443
    %1887 = vmatpush1.msra.mxu0 %v442
    %1888 = vmatprep.subr.mxu0 %v439
    %1889 = vmatpush1.msra.mxu0 %v438
    %1890 = vmatprep.subr.mxu0 %v435
    %1891 = vmatpush1.msra.mxu0 %v434
    %1892 = vmatprep.subr.mxu0 %v431
    %1893 = vmatpush1.msra.mxu0 %v430
    %1894 = vmatprep.subr.mxu0 %v427
    %1895 = vmatpush1.msra.mxu0 %v426
    %1896 = vmatprep.subr.mxu0 %v423
    %1897 = vmatpush1.msra.mxu0 %v422
    %1898 = vmatprep.subr.mxu0 %v419
    %1899 = vmatpush1.msra.mxu0 %v418
    %1900 = vmatprep.subr.mxu0 %v415
    %1901 = vmatpush1.msra.mxu0 %v414
    %1902 = vmatprep.subr.mxu0 %v411
    %1903 = vmatpush1.msra.mxu0 %v410
    %1904 = vmatprep.subr.mxu0 %v407
    %1905 = vmatpush1.msra.mxu0 %v406
    %1906 = vmatprep.subr.mxu0 %v403
    %1907 = vmatpush1.msra.mxu0 %v402
    %1908 = vmatprep.subr.mxu0 %v399
    %1909 = vmatpush1.msra.mxu0 %v398
    %1910 = vmatprep.subr.mxu0 %v395
    %1911 = vmatpush1.msra.mxu0 %v394
    %1912 = vmatprep.subr.mxu0 %v391
    %1913 = vmatpush1.msra.mxu0 %v390
    %1914 = vmatprep.subr.mxu0 0.0
    %1915 = vmatpush2.msra.mxu0 0.0
    %1916 = vmatprep.subr.mxu0 0.0
    %1917 = vmatpush2.msra.mxu0 0.0
    %1918 = vmatprep.subr.mxu0 0.0
    %1919 = vmatpush2.msra.mxu0 0.0
    %1920 = vmatprep.subr.mxu0 0.0
    %1921 = vmatpush2.msra.mxu0 0.0
    %1922 = vmatprep.subr.mxu0 0.0
    %1923 = vmatpush2.msra.mxu0 0.0
    %1924 = vmatprep.subr.mxu0 0.0
    %1925 = vmatpush2.msra.mxu0 0.0
    %1926 = vmatprep.subr.mxu0 0.0
    %1927 = vmatpush2.msra.mxu0 0.0
    %1928 = vmatprep.subr.mxu0 0.0
    %1929 = vmatpush2.msra.mxu0 0.0
    %1930 = vmatprep.subr.mxu0 0.0
    %1931 = vmatpush2.msra.mxu0 0.0
    %1932 = vmatprep.subr.mxu0 0.0
    %1933 = vmatpush2.msra.mxu0 0.0
    %1934 = vmatprep.subr.mxu0 0.0
    %1935 = vmatpush2.msra.mxu0 0.0
    %1936 = vmatprep.subr.mxu0 0.0
    %1937 = vmatpush2.msra.mxu0 0.0
    %1938 = vmatprep.subr.mxu0 0.0
    %1939 = vmatpush2.msra.mxu0 0.0
    %1940 = vmatprep.subr.mxu0 0.0
    %1941 = vmatpush2.msra.mxu0 0.0
    %1942 = vmatprep.subr.mxu0 0.0
    %1943 = vmatpush2.msra.mxu0 0.0
    %1944 = vmatprep.subr.mxu0 0.0
    %1945 = vmatpush2.msra.mxu0 0.0
    %1946 = vmatprep.mubr.f32.mxu0 0.0
    %1947 = vmatmul.mubr.f32.gmra.mxu0 %v1785
    %v1948 = vpop.f32.mrf.mxu0
    %v1949 = vadd.f32 %v1802, %v1948
    %v1950 = vpop.f32.mrf.mxu0
    %v1951 = vadd.f32 %v1806, %v1950
    %1952 = vdwg.mxu0
    %v1953 = vxor.u32 %v1878, 2147483648
    %v1954 = vmul.f32 %v1953, 1.442695
    %v1955 = vpow.pop %v1954
    %v1956 = vadd.f32 %v1955, 1.0
    %v1957 = vrcp.pop %v1956
    %v1958 = vmul.f32 1.0, %v1957
    %v1959 = vxor.u32 %v1880, 2147483648
    %v1960 = vmul.f32 %v1959, 1.442695
    %v1961 = vpow.pop %v1960
    %v1962 = vadd.f32 %v1961, 1.0
    %v1963 = vrcp.pop %v1962
    %v1964 = vmul.f32 1.0, %v1963
    %v1965 = vtanh.pop %v1949
    %v1966 = vxor.u32 %v1951, 2147483648
    %v1967 = vmul.f32 %v1966, 1.442695
    %v1968 = vpow.pop %v1967
    %v1969 = vadd.f32 %v1968, 1.0
    %v1970 = vrcp.pop %v1969
    %v1971 = vmul.f32 1.0, %v1970
    %v1972 = vmul.f32 %v1964, %v1783
    %v1973 = vmul.f32 %v1958, %v1965
    %v1974 = vadd.f32 %v1972, %v1973
    %v1975 = vtanh.pop %v1974
    %v1976 = vmul.f32 %v1971, %v1975
    %1977 = vst [vmem:[#allocation3 + $0x7] sm:$0x1] %v1976
    %1978 = vst [vmem:[#allocation4] sm:$0x1] %v1976
    %v1979 = vld [vmem:[#allocation3] sm:$0xff]
    %v1980 = vld [vmem:[%s6] sm:$0xff]
    %v1981 = vld [vmem:[%s6 + $0x8] sm:$0xff]
    %v1982 = vld [vmem:[%s6 + $0x10] sm:$0xff]
    %v1983 = vld [vmem:[%s6 + $0x18] sm:$0xff]
    %v1984 = vld [vmem:[%s6 + $0x20] sm:$0xff]
    %v1985 = vld [vmem:[%s6 + $0x28] sm:$0xff]
    %v1986 = vld [vmem:[%s6 + $0x30] sm:$0xff]
    %v1987 = vld [vmem:[%s6 + $0x38] sm:$0xff]
    %v1988 = vld [vmem:[%s6 + $0x40] sm:$0xff]
    %v1989 = vld [vmem:[%s6 + $0x48] sm:$0xff]
    %v1990 = vld [vmem:[%s6 + $0x50] sm:$0xff]
    %v1991 = vld [vmem:[%s6 + $0x58] sm:$0xff]
    %v1992 = vld [vmem:[%s6 + $0x60] sm:$0xff]
    %v1993 = vld [vmem:[%s6 + $0x68] sm:$0xff]
    %v1994 = vld [vmem:[%s6 + $0x70] sm:$0xff]
    %v1995 = vld [vmem:[%s6 + $0x78] sm:$0xff]
    %v1996 = vld [vmem:[#allocation4] sm:$0xff]
    %v1997 = vld [vmem:[%s7] sm:$0xff]
    %v1998 = vld [vmem:[%s7 + $0x8] sm:$0xff]
    %v1999 = vld [vmem:[%s7 + $0x10] sm:$0xff]
    %v2000 = vld [vmem:[%s7 + $0x18] sm:$0xff]
    %v2001 = vld [vmem:[%s7 + $0x20] sm:$0xff]
    %v2002 = vld [vmem:[%s7 + $0x28] sm:$0xff]
    %v2003 = vld [vmem:[%s7 + $0x30] sm:$0xff]
    %v2004 = vld [vmem:[%s7 + $0x38] sm:$0xff]
    %v2005 = vld [vmem:[%s7 + $0x40] sm:$0xff]
    %v2006 = vld [vmem:[%s7 + $0x48] sm:$0xff]
    %v2007 = vld [vmem:[%s7 + $0x50] sm:$0xff]
    %v2008 = vld [vmem:[%s7 + $0x58] sm:$0xff]
    %v2009 = vld [vmem:[%s7 + $0x60] sm:$0xff]
    %v2010 = vld [vmem:[%s7 + $0x68] sm:$0xff]
    %v2011 = vld [vmem:[%s7 + $0x70] sm:$0xff]
    %v2012 = vld [vmem:[%s7 + $0x78] sm:$0xff]
    %2013 = vmatprep.subr.mxu0 0.0
    %2014 = vmatpush1.msra.mxu0 %v2012
    %2015 = vmatprep.subr.mxu0 0.0
    %2016 = vmatpush1.msra.mxu0 %v2011
    %2017 = vmatprep.subr.mxu0 0.0
    %2018 = vmatpush1.msra.mxu0 %v2010
    %2019 = vmatprep.subr.mxu0 0.0
    %2020 = vmatpush1.msra.mxu0 %v2009
    %2021 = vmatprep.subr.mxu0 0.0
    %2022 = vmatpush1.msra.mxu0 %v2008
    %2023 = vmatprep.subr.mxu0 0.0
    %2024 = vmatpush1.msra.mxu0 %v2007
    %2025 = vmatprep.subr.mxu0 0.0
    %2026 = vmatpush1.msra.mxu0 %v2006
    %2027 = vmatprep.subr.mxu0 0.0
    %2028 = vmatpush1.msra.mxu0 %v2005
    %2029 = vmatprep.subr.mxu0 0.0
    %2030 = vmatpush1.msra.mxu0 %v2004
    %2031 = vmatprep.subr.mxu0 0.0
    %2032 = vmatpush1.msra.mxu0 %v2003
    %2033 = vmatprep.subr.mxu0 0.0
    %2034 = vmatpush1.msra.mxu0 %v2002
    %2035 = vmatprep.subr.mxu0 0.0
    %2036 = vmatpush1.msra.mxu0 %v2001
    %2037 = vmatprep.subr.mxu0 0.0
    %2038 = vmatpush1.msra.mxu0 %v2000
    %2039 = vmatprep.subr.mxu0 0.0
    %2040 = vmatpush1.msra.mxu0 %v1999
    %2041 = vmatprep.subr.mxu0 0.0
    %2042 = vmatpush1.msra.mxu0 %v1998
    %2043 = vmatprep.subr.mxu0 0.0
    %2044 = vmatpush1.msra.mxu0 %v1997
    %2045 = vmatprep.subr.mxu0 0.0
    %2046 = vmatpush2.msra.mxu0 0.0
    %2047 = vmatprep.subr.mxu0 0.0
    %2048 = vmatpush2.msra.mxu0 0.0
    %2049 = vmatprep.subr.mxu0 0.0
    %2050 = vmatpush2.msra.mxu0 0.0
    %2051 = vmatprep.subr.mxu0 0.0
    %2052 = vmatpush2.msra.mxu0 0.0
    %2053 = vmatprep.subr.mxu0 0.0
    %2054 = vmatpush2.msra.mxu0 0.0
    %2055 = vmatprep.subr.mxu0 0.0
    %2056 = vmatpush2.msra.mxu0 0.0
    %2057 = vmatprep.subr.mxu0 0.0
    %2058 = vmatpush2.msra.mxu0 0.0
    %2059 = vmatprep.subr.mxu0 0.0
    %2060 = vmatpush2.msra.mxu0 0.0
    %2061 = vmatprep.subr.mxu0 0.0
    %2062 = vmatpush2.msra.mxu0 0.0
    %2063 = vmatprep.subr.mxu0 0.0
    %2064 = vmatpush2.msra.mxu0 0.0
    %2065 = vmatprep.subr.mxu0 0.0
    %2066 = vmatpush2.msra.mxu0 0.0
    %2067 = vmatprep.subr.mxu0 0.0
    %2068 = vmatpush2.msra.mxu0 0.0
    %2069 = vmatprep.subr.mxu0 0.0
    %2070 = vmatpush2.msra.mxu0 0.0
    %2071 = vmatprep.subr.mxu0 0.0
    %2072 = vmatpush2.msra.mxu0 0.0
    %2073 = vmatprep.subr.mxu0 0.0
    %2074 = vmatpush2.msra.mxu0 0.0
    %2075 = vmatprep.subr.mxu0 0.0
    %2076 = vmatpush2.msra.mxu0 0.0
    %2077 = vmatprep.mubr.f32.mxu0 0.0
    %2078 = vmatmul.mubr.f32.gmra.mxu0 %v1996
    %v2079 = vpop.f32.mrf.mxu0
    %v2080 = vadd.f32 0.0, %v2079
    %v2081 = vpop.f32.mrf.mxu0
    %2082 = vdwg.mxu0
    %2083 = vmatprep.subr.mxu0 0.0
    %2084 = vmatpush1.msra.mxu0 %v1995
    %2085 = vmatprep.subr.mxu0 0.0
    %2086 = vmatpush1.msra.mxu0 %v1994
    %2087 = vmatprep.subr.mxu0 0.0
    %2088 = vmatpush1.msra.mxu0 %v1993
    %2089 = vmatprep.subr.mxu0 0.0
    %2090 = vmatpush1.msra.mxu0 %v1992
    %2091 = vmatprep.subr.mxu0 0.0
    %2092 = vmatpush1.msra.mxu0 %v1991
    %2093 = vmatprep.subr.mxu0 0.0
    %2094 = vmatpush1.msra.mxu0 %v1990
    %2095 = vmatprep.subr.mxu0 0.0
    %2096 = vmatpush1.msra.mxu0 %v1989
    %2097 = vmatprep.subr.mxu0 0.0
    %2098 = vmatpush1.msra.mxu0 %v1988
    %2099 = vmatprep.subr.mxu0 0.0
    %2100 = vmatpush1.msra.mxu0 %v1987
    %2101 = vmatprep.subr.mxu0 0.0
    %2102 = vmatpush1.msra.mxu0 %v1986
    %2103 = vmatprep.subr.mxu0 0.0
    %2104 = vmatpush1.msra.mxu0 %v1985
    %2105 = vmatprep.subr.mxu0 0.0
    %2106 = vmatpush1.msra.mxu0 %v1984
    %2107 = vmatprep.subr.mxu0 0.0
    %2108 = vmatpush1.msra.mxu0 %v1983
    %2109 = vmatprep.subr.mxu0 0.0
    %2110 = vmatpush1.msra.mxu0 %v1982
    %2111 = vmatprep.subr.mxu0 0.0
    %2112 = vmatpush1.msra.mxu0 %v1981
    %2113 = vmatprep.subr.mxu0 0.0
    %2114 = vmatpush1.msra.mxu0 %v1980
    %2115 = vmatprep.subr.mxu0 0.0
    %2116 = vmatpush2.msra.mxu0 0.0
    %2117 = vmatprep.subr.mxu0 0.0
    %2118 = vmatpush2.msra.mxu0 0.0
    %2119 = vmatprep.subr.mxu0 0.0
    %2120 = vmatpush2.msra.mxu0 0.0
    %2121 = vmatprep.subr.mxu0 0.0
    %2122 = vmatpush2.msra.mxu0 0.0
    %2123 = vmatprep.subr.mxu0 0.0
    %2124 = vmatpush2.msra.mxu0 0.0
    %2125 = vmatprep.subr.mxu0 0.0
    %2126 = vmatpush2.msra.mxu0 0.0
    %2127 = vmatprep.subr.mxu0 0.0
    %2128 = vmatpush2.msra.mxu0 0.0
    %2129 = vmatprep.subr.mxu0 0.0
    %2130 = vmatpush2.msra.mxu0 0.0
    %2131 = vmatprep.subr.mxu0 0.0
    %2132 = vmatpush2.msra.mxu0 0.0
    %2133 = vmatprep.subr.mxu0 0.0
    %2134 = vmatpush2.msra.mxu0 0.0
    %2135 = vmatprep.subr.mxu0 0.0
    %2136 = vmatpush2.msra.mxu0 0.0
    %2137 = vmatprep.subr.mxu0 0.0
    %2138 = vmatpush2.msra.mxu0 0.0
    %2139 = vmatprep.subr.mxu0 0.0
    %2140 = vmatpush2.msra.mxu0 0.0
    %2141 = vmatprep.subr.mxu0 0.0
    %2142 = vmatpush2.msra.mxu0 0.0
    %2143 = vmatprep.subr.mxu0 0.0
    %2144 = vmatpush2.msra.mxu0 0.0
    %2145 = vmatprep.subr.mxu0 0.0
    %2146 = vmatpush2.msra.mxu0 0.0
    %2147 = vmatprep.mubr.f32.mxu0 0.0
    %2148 = vmatmul.mubr.f32.gmra.mxu0 %v1979
    %v2149 = vpop.f32.mrf.mxu0
    %v2150 = vadd.f32 %v2080, %v2149
    %v2151 = vpop.f32.mrf.mxu0
    %2152 = vdwg.mxu0
    %v2153 = vld [vmem:[%s8] sm:$0x1]
    %v2155 = vlaneseq
    %v2156 = vshrl.u32 %v2155, 7
    %v2157 = vsub.s32 0, %v2156
    %v2158 = vrot.slane %v2153, %v2157
    %v2160 = vadd.f32 %v2150, %v2158
    %2161 = vst [vmem:[#allocation5] sm:$0xff] %v2160
    // Predicated region
    $region38: #{tagger_forward.1} parent=1 // pred_check
      _
    $region39: #{tagger_forward.1} parent=1 // pred_check_branch
      %2163 = sbr.rel (0) target = $region41
    $region40: #{tagger_forward.1} parent=1 // pred_region
      %s2165 = ssub.s32 128, 128
      %2166 = vsyncadd [#allocation6], %s2165
      %s2168 = sshll.u32 [#allocation5], 4
      %s2169 = int_to_ptr.vmem [resolvable:$true] %s2168
      %2171 = dma.vmem_to_hbm [thread:$0]  %s2169, 128, %s9, [#allocation6]
    $region41: #{tagger_forward.1} parent=1 // pred_fallthru
      _
    // Predicated region
    $region42: #{tagger_forward.1} parent=1 // pred_check
      _
    $region43: #{tagger_forward.1} parent=1 // pred_check_branch
      %2173 = sbr.rel (0) target = $region45
    $region44: #{tagger_forward.1} parent=1 // pred_region
      %2174 = dma.done [#allocation6], 128
    $region45: #{tagger_forward.1} parent=1 // pred_fallthru
      _
    %2175 = vsyncpa [#allocation6], 1

</llo_original>
